<compile_context>
chip_gen: v6e
topology: v6e:2x2x1
jax: 0.10.0
libtpu: 0.0.40
codegen_flags: <defaults>
</compile_context>

<pallas_src>
import math
import numpy as np
import jax
import jax.numpy as jnp
from jax.experimental import pallas as pl
from jax.experimental.pallas import tpu as pltpu

# -------------------- static configuration --------------------
D_MODEL = 32
N_HEADS = 4
HEAD_DIM = D_MODEL // N_HEADS
DIM_FFN = 64
N_LEVELS = 4
N_POINTS = 4
LP = N_LEVELS * N_POINTS            # 16 samples per head
NH_LP = N_HEADS * LP                # 64
NEIGHBORHOOD_SIZES = (3, 5, 7, 9)
ROPE_SPATIAL_BASE_THETA = 100.0
NEG_INF = -1e9
LN_EPS = 1e-5
VMEM_LIMIT_BYTES = 48 * 1024 * 1024   # above default scoped limits, below physical on all gens


# -------------------- host-side constant tables --------------------
def _build_rot_matrix():
    """x @ ROT applies the per-head rotate-half (with sign) used by RoPE."""
    rot = np.zeros((D_MODEL, D_MODEL), np.float32)
    hh = HEAD_DIM // 2
    for h in range(N_HEADS):
        base = h * HEAD_DIM
        for i in range(hh):
            rot[base + hh + i, base + i] = -1.0   # first half  <- -second half
            rot[base + i, base + hh + i] = 1.0    # second half <-  first half
    return rot


def _build_head_masks(width):
    g = width // N_HEADS
    m = np.zeros((N_HEADS, width), np.float32)
    for h in range(N_HEADS):
        m[h, h * g:(h + 1) * g] = 1.0
    return m


_ROT_NP = _build_rot_matrix()
_HM32_NP = _build_head_masks(D_MODEL)
_NEGBLK_NP = (1.0 - _build_head_masks(NH_LP)) * NEG_INF   # -inf outside each head's 16-col group


# -------------------- in-kernel helpers --------------------
def _ln(x, gamma, beta):
    mean = jnp.mean(x, axis=-1, keepdims=True)
    var = jnp.mean(jnp.square(x - mean), axis=-1, keepdims=True)
    return (x - mean) * jax.lax.rsqrt(var + LN_EPS) * gamma + beta


def _softmax_last(s):
    s = s - jnp.max(s, axis=-1, keepdims=True)
    e = jnp.exp(s)
    return e * pl.reciprocal(jnp.sum(e, axis=-1, keepdims=True), approx=True)


# -------------------- Pallas kernels --------------------
def _self_attn_msdeform_pre_kernel(
        qt_ref, qf_ref, bic_ref, bir_ref, umask_ref,
        cos_t_ref, sin_t_ref, cos_f_ref, sin_f_ref, hm_ref,
        sa_g_ref, sa_b_ref, wq_ref, wqr_ref, wk_ref, wkr_ref, wv_ref, wo_ref,
        md_g_ref, md_b_ref, woff_ref, wattw_ref, negblk_ref,
        x1_ref, off_ref, attw_ref):
    """Pre-norm multi-head self-attention with 2D RoPE (+residual) and the
    deformable-attention offset / attention-weight projections, per query-row tile.

    The batch mask is computed in-kernel from int32 batch indices (no N^2 HBM mask).
    Keys/values always cover the full padded query set; recomputing their projection
    per tile is cheap relative to the N^2 attention itself.
    """
    x = qt_ref[...]                                   # (TQ, D)  residual input
    xf = qf_ref[...]                                  # (NK, D)  full (padded) query set
    g = sa_g_ref[...]
    b = sa_b_ref[...]
    xn_t = _ln(x, g, b)
    xn_f = _ln(xf, g, b)

    # full-width projections (no per-head slicing; RoPE rotate-half folded into W @ ROT)
    q = jnp.dot(xn_t, wq_ref[...], preferred_element_type=jnp.float32)
    q_r = jnp.dot(xn_t, wqr_ref[...], preferred_element_type=jnp.float32)
    k = jnp.dot(xn_f, wk_ref[...], preferred_element_type=jnp.float32)
    k_r = jnp.dot(xn_f, wkr_ref[...], preferred_element_type=jnp.float32)
    v = jnp.dot(xn_f, wv_ref[...], preferred_element_type=jnp.float32)

    q_rot = q * cos_t_ref[...] + q_r * sin_t_ref[...]
    k_rot = k * cos_f_ref[...] + k_r * sin_f_ref[...]

    # per-head attention via head-masked full-width operands, batch dim = heads
    hm = hm_ref[...]                                  # (H, D)
    qm = hm[:, None, :] * q_rot[None, :, :]           # (H, TQ, D)
    kb = jnp.broadcast_to(k_rot[None, :, :], (N_HEADS,) + k_rot.shape)
    vm = hm[:, None, :] * v[None, :, :]               # (H, NK, D)

    s = jnp.einsum('hnd,hmd->hnm', qm, kb,
                   preferred_element_type=jnp.float32) * (1.0 / math.sqrt(HEAD_DIM))
    bmask = jnp.where(bic_ref[...] == bir_ref[...], 0.0, NEG_INF).astype(jnp.float32)
    s = s + bmask[None, :, :] + umask_ref[...]
    p = _softmax_last(s)                              # (H, TQ, NK)
    ctx = jnp.einsum('hnm,hmd->hnd', p, vm, preferred_element_type=jnp.float32)
    ctx = jnp.sum(ctx, axis=0)                        # heads live in disjoint lanes -> concat
    x1 = x + jnp.dot(ctx, wo_ref[...], preferred_element_type=jnp.float32)
    x1_ref[...] = x1

    # ---- sparse MS-deformable attention: sampling-offset / attention-weight projections
    xn2 = _ln(x1, md_g_ref[...], md_b_ref[...])
    off_ref[...] = jnp.dot(xn2, woff_ref[...], preferred_element_type=jnp.float32)
    logits = jnp.dot(xn2, wattw_ref[...], preferred_element_type=jnp.float32)    # (TQ, 64)
    # per-head (group-of-16) softmax, kept lane-dense: expand to (TQ, H, 64) with -inf
    # outside each head's group; softmax over the last axis; store the head-masked form.
    t = logits[:, None, :] + negblk_ref[...][None, :, :]
    attw_ref[...] = _softmax_last(t)                  # (TQ, H, 64)


def _msdeform_na_ffn_kernel(
        x_ref, attw_ref, sampled_ref, mmd_ref,
        na_g_ref, na_b_ref, naq_ref, naqr_ref, nak_ref, nakr_ref, hm_ref, mna_ref,
        qcos_ref, qsin_ref, nbf_ref, kcos_ref, ksin_ref, nbmask_ref,
        ffn_g_ref, ffn_b_ref, w1_ref, b1_ref, w2_ref, b2_ref,
        out_ref):
    """Deformable-attention combine + sparse neighborhood attention + FFN, fused per
    query-row tile (fully per-query independent -> "parallel" grid axis)."""
    x = x_ref[...]                                            # (TQ, D)
    hsel = jax.lax.broadcasted_iota(jnp.int32, (1, N_HEADS, 1), 1)

    # ---- MS-deformable attention: attw-weighted sum of pre-sampled RAW features,
    #      then the folded per-head (value_proj @ out_proj) matrices + residual.
    attw = attw_ref[...]                                      # (TQ, H, 64) head-masked weights
    weighted = jnp.einsum('nhj,njd->nhd', attw, sampled_ref[...],
                          preferred_element_type=jnp.float32)             # (TQ, H, D)
    md_out = jnp.zeros_like(x)
    for h in range(N_HEADS):
        w_h = jnp.sum(jnp.where(hsel == h, weighted, 0.0), axis=1)        # (TQ, D)
        md_out = md_out + jnp.dot(w_h, mmd_ref[h], preferred_element_type=jnp.float32)
    x = x + md_out
    # TODO(synk): background_embedding for out-of-bounds deformable samples not modeled.

    # ---- sparse neighborhood attention (per-query key sets, batch dim = queries) ----
    xn = _ln(x, na_g_ref[...], na_b_ref[...])
    q = jnp.dot(xn, naq_ref[...], preferred_element_type=jnp.float32)
    q_r = jnp.dot(xn, naqr_ref[...], preferred_element_type=jnp.float32)
    q_rot = q * qcos_ref[...] + q_r * qsin_ref[...]
    hm = hm_ref[...]
    qm = q_rot[:, None, :] * hm[None, :, :]                   # (TQ, H, D)

    f = nbf_ref[...]                                          # (TQ, K, D) raw gathered features
    tq = f.shape[0]
    wk_b = jnp.broadcast_to(nak_ref[...][None, :, :], (tq, D_MODEL, D_MODEL))
    wkr_b = jnp.broadcast_to(nakr_ref[...][None, :, :], (tq, D_MODEL, D_MODEL))
    kproj = jnp.einsum('nkd,nde->nke', f, wk_b, preferred_element_type=jnp.float32)
    kproj_r = jnp.einsum('nkd,nde->nke', f, wkr_b, preferred_element_type=jnp.float32)
    k_rot = kproj * kcos_ref[...] + kproj_r * ksin_ref[...]

    s = jnp.einsum('nhd,nkd->nhk', qm, k_rot,
                   preferred_element_type=jnp.float32) * (1.0 / math.sqrt(HEAD_DIM))
    s = s + nbmask_ref[...][:, None, :]
    p = _softmax_last(s)                                      # (TQ, H, K)
    pf = jnp.einsum('nhk,nkd->nhd', p, f, preferred_element_type=jnp.float32)
    na_out = jnp.zeros_like(x)
    for h in range(N_HEADS):
        pf_h = jnp.sum(jnp.where(hsel == h, pf, 0.0), axis=1)
        na_out = na_out + jnp.dot(pf_h, mna_ref[h], preferred_element_type=jnp.float32)
    x = x + na_out

    # ---- FFN ----
    xn = _ln(x, ffn_g_ref[...], ffn_b_ref[...])
    h1 = jnp.dot(xn, w1_ref[...], preferred_element_type=jnp.float32) + b1_ref[...]
    # TODO(synk): PyTorch nn.GELU default is exact erf GELU; tanh approximation used here.
    h1 = jax.nn.gelu(h1, approximate=True)
    out_ref[...] = x + jnp.dot(h1, w2_ref[...], preferred_element_type=jnp.float32) + b2_ref[...]


# -------------------- JAX glue (gathers, RoPE tables, params) --------------------
def _rope_tables(pos_yx):
    """cos/sin tables for shared-head axial 2D RoPE, duplicated across halves + heads.

    pos_yx: (..., 2) pixel positions at the finest level -> (..., D_MODEL) tables."""
    # TODO(synk): exact emsim RoPE frequency-group / level-theta pattern unavailable;
    # using shared-head axial 2D RoPE with spatial_base_theta only.
    ppd = HEAD_DIM // 4
    freqs = ROPE_SPATIAL_BASE_THETA ** (-jnp.arange(ppd, dtype=jnp.float32) / max(ppd, 1))
    ang = jnp.concatenate([pos_yx[..., 0:1] * freqs, pos_yx[..., 1:2] * freqs], axis=-1)
    ang = jnp.concatenate([ang, ang], axis=-1)                      # per-head (head_dim,)
    ang = jnp.tile(ang, (1,) * (pos_yx.ndim - 1) + (N_HEADS,))      # (..., D_MODEL)
    return jnp.cos(ang), jnp.sin(ang)


def _bilinear_sample_raw(feat_l, batch_idx, yx, Hl, Wl):
    """feat_l: (B, Hmax, Wmax, D); yx: (N, H, P, 2) level pixel coords -> (N, H, P, D)."""
    y = yx[..., 0]
    x = yx[..., 1]
    y0f = jnp.floor(y)
    x0f = jnp.floor(x)
    y0 = y0f.astype(jnp.int32)
    x0 = x0f.astype(jnp.int32)
    wy1 = y - y0f
    wx1 = x - x0f
    wy0 = 1.0 - wy1
    wx0 = 1.0 - wx1
    b = batch_idx[:, None, None]
    out = jnp.zeros(y.shape + (D_MODEL,), jnp.float32)
    for dy, wy in ((0, wy0), (1, wy1)):
        for dx, wx in ((0, wx0), (1, wx1)):
            yy = y0 + dy
            xx = x0 + dx
            valid = (yy >= 0) & (yy < Hl) & (xx >= 0) & (xx < Wl)
            yyc = jnp.clip(yy, 0, Hl - 1)
            xxc = jnp.clip(xx, 0, Wl - 1)
            vals = feat_l[b, yyc, xxc]                          # (N, H, P, D)
            out = out + vals * (wy * wx * valid.astype(jnp.float32))[..., None]
    return out


def _gather_neighborhood(feat, batch_idx, q_pos, level_shapes, nbhd_sizes, Hmax, Wmax):
    """Gather per-query neighborhood RAW features at every level.

    Returns (N, K, D) features, (N, K, 2) key positions (finest-level coords), (N, K) validity."""
    # TODO(synk): neighborhood / bilinear gathers are done with XLA fancy indexing between the
    # two pallas_calls; a scalar-prefetch + make_async_copy DMA gather is not implemented here.
    p_norm = q_pos / jnp.array([Hmax, Wmax], jnp.float32)
    feats, poss, valids = [], [], []
    for l, (Hl, Wl) in enumerate(level_shapes):
        nsz = nbhd_sizes[l]
        center = jnp.floor(p_norm * jnp.array([Hl, Wl], jnp.float32)).astype(jnp.int32)
        d = np.arange(nsz, dtype=np.int32) - nsz // 2
        di, dj = np.meshgrid(d, d, indexing="ij")
        dij = jnp.asarray(np.stack([di.ravel(), dj.ravel()], axis=-1))   # (nsz*nsz, 2)
        idx = center[:, None, :] + dij[None, :, :]                       # (N, nsz*nsz, 2)
        valid = ((idx[..., 0] >= 0) & (idx[..., 0] < Hl)
                 & (idx[..., 1] >= 0) & (idx[..., 1] < Wl))
        idx_c = jnp.clip(idx, 0, jnp.array([Hl - 1, Wl - 1], jnp.int32))
        b = batch_idx[:, None]
        f = feat[b, l, idx_c[..., 0], idx_c[..., 1]]                     # (N, nsz*nsz, D)
        kpos = (idx.astype(jnp.float32) + 0.5) * jnp.array(
            [Hmax / Hl, Wmax / Wl], jnp.float32)
        feats.append(f)
        poss.append(kpos)
        valids.append(valid)
    return (jnp.concatenate(feats, axis=1),
            jnp.concatenate(poss, axis=1),
            jnp.concatenate(valids, axis=1))


def init_params(key):
    ks = jax.random.split(key, 16)
    s = 0.05
    ones = jnp.ones((1, D_MODEL), jnp.float32)
    zeros = jnp.zeros((1, D_MODEL), jnp.float32)
    nrm = lambda k, shp: (jax.random.normal(k, shp, jnp.float32) * s)
    return {
        # self-attention (RoPE), attn_proj_bias=False
        "sa_gamma": ones, "sa_beta": zeros,
        "sa_wqkv": nrm(ks[0], (D_MODEL, 3 * D_MODEL)),
        "sa_wo": nrm(ks[1], (D_MODEL, D_MODEL)),
        # sparse MS deformable attention
        "md_gamma": ones, "md_beta": zeros,
        "md_woff": nrm(ks[2], (D_MODEL, NH_LP * 2)),
        "md_wattw": nrm(ks[3], (D_MODEL, NH_LP)),
        "md_wval": nrm(ks[4], (D_MODEL, D_MODEL)),
        "md_wo": nrm(ks[5], (D_MODEL, D_MODEL)),
        # sparse neighborhood attention
        "na_gamma": ones, "na_beta": zeros,
        "na_wq": nrm(ks[6], (D_MODEL, D_MODEL)),
        "na_wk": nrm(ks[7], (D_MODEL, D_MODEL)),
        "na_wv": nrm(ks[8], (D_MODEL, D_MODEL)),
        "na_wo": nrm(ks[9], (D_MODEL, D_MODEL)),
        # FFN
        "ffn_gamma": ones, "ffn_beta": zeros,
        "ffn_w1": nrm(ks[10], (D_MODEL, DIM_FFN)),
        "ffn_b1": nrm(ks[11], (1, DIM_FFN)),
        "ffn_w2": nrm(ks[12], (DIM_FFN, D_MODEL)),
        "ffn_b2": nrm(ks[13], (1, D_MODEL)),
    }


def _round_up(a, m):
    return (a + m - 1) // m * m


# -------------------- forward (mirrors TransformerDecoderLayer.forward) --------------------
def transformer_decoder_layer_forward(params, queries, query_batch_offsets,
                                      query_spatial_positions, stacked_feature_maps,
                                      level_spatial_shapes, attn_mask=None,
                                      background_embedding=None):
    N = queries.shape[0]
    lvl_np = np.asarray(level_spatial_shapes)
    max_level_index = np.argmax(lvl_np, axis=0)
    assert len(np.unique(max_level_index)) == 1
    Hmax = int(lvl_np[int(max_level_index[0]), 0])
    Wmax = int(lvl_np[int(max_level_index[0]), 1])
    level_shapes = [(int(h), int(w)) for h, w in lvl_np]

    # ---------- padding to a whole number of query-row tiles ----------
    TQ = 128 if N > 128 else _round_up(max(N, 1), 8)
    Np = _round_up(N, TQ)
    pad = Np - N
    q_pad = jnp.pad(queries, ((0, pad), (0, 0)))
    pos_pad = jnp.pad(query_spatial_positions, ((0, pad), (0, 0)))

    batch_idx = jnp.searchsorted(query_batch_offsets[1:], jnp.arange(N),
                                 side="right").astype(jnp.int32)
    bi_mask = jnp.pad(batch_idx, (0, pad), constant_values=-1)   # padded rows match nothing real
    bi_gather = jnp.pad(batch_idx, (0, pad), constant_values=0)
    bic = bi_mask.reshape(Np, 1)
    bir = bi_mask.reshape(1, Np)

    qcos, qsin = _rope_tables(pos_pad)                           # (Np, D_MODEL)

    # host-side constant tables / folded weights
    rot = jnp.asarray(_ROT_NP)
    hm32 = jnp.asarray(_HM32_NP)
    negblk = jnp.asarray(_NEGBLK_NP)
    wq = params["sa_wqkv"][:, :D_MODEL]
    wk = params["sa_wqkv"][:, D_MODEL:2 * D_MODEL]
    wv = params["sa_wqkv"][:, 2 * D_MODEL:]
    wq_rot = jnp.dot(wq, rot)
    wk_rot = jnp.dot(wk, rot)
    na_wq_rot = jnp.dot(params["na_wq"], rot)
    na_wk_rot = jnp.dot(params["na_wk"], rot)
    # folded per-head (value_proj slice @ out_proj slice) matrices (no biases: attn_proj_bias=False)
    mmd = jnp.einsum('dhk,hke->hde',
                     params["md_wval"].reshape(D_MODEL, N_HEADS, HEAD_DIM),
                     params["md_wo"].reshape(N_HEADS, HEAD_DIM, D_MODEL))
    mna = jnp.einsum('dhk,hke->hde',
                     params["na_wv"].reshape(D_MODEL, N_HEADS, HEAD_DIM),
                     params["na_wo"].reshape(N_HEADS, HEAD_DIM, D_MODEL))

    if attn_mask is None:
        umask = jnp.zeros((1, Np), jnp.float32)
        umask_spec = pl.BlockSpec((1, Np), lambda i: (0, 0))
    else:
        am = jnp.asarray(attn_mask)
        if am.dtype == jnp.bool_:
            am = jnp.where(am, NEG_INF, 0.0)
        umask = jnp.pad(am.astype(jnp.float32), ((0, pad), (0, pad)))
        umask_spec = pl.BlockSpec((TQ, Np), lambda i: (i, 0))

    grid = (Np // TQ,)
    row = lambda i: (i, 0)
    row3 = lambda i: (i, 0, 0)
    full2 = lambda i: (0, 0)
    full3 = lambda i: (0, 0, 0)
    cparams = pltpu.CompilerParams(dimension_semantics=("parallel",),
                                   vmem_limit_bytes=VMEM_LIMIT_BYTES)

    # ---------- kernel A: self-attention + deformable-attn projections ----------
    # TODO(synk): at very large N the (H, TQ, N) score tile should be tiled flash-style
    # over a KV ("arbitrary") grid axis; not needed at these sizes.
    x1, off, attw = pl.pallas_call(
        _self_attn_msdeform_pre_kernel,
        grid=grid,
        out_shape=(jax.ShapeDtypeStruct((Np, D_MODEL), jnp.float32),
                   jax.ShapeDtypeStruct((Np, NH_LP * 2), jnp.float32),
                   jax.ShapeDtypeStruct((Np, N_HEADS, NH_LP), jnp.float32)),
        in_specs=[
            pl.BlockSpec((TQ, D_MODEL), row),            # queries (row tile)
            pl.BlockSpec((Np, D_MODEL), full2),          # queries (full, keys/values)
            pl.BlockSpec((TQ, 1), row),                  # batch idx (col)
            pl.BlockSpec((1, Np), full2),                # batch idx (row)
            umask_spec,                                  # optional user attn mask
            pl.BlockSpec((TQ, D_MODEL), row),            # RoPE cos (tile)
            pl.BlockSpec((TQ, D_MODEL), row),            # RoPE sin (tile)
            pl.BlockSpec((Np, D_MODEL), full2),          # RoPE cos (full)
            pl.BlockSpec((Np, D_MODEL), full2),          # RoPE sin (full)
            pl.BlockSpec((N_HEADS, D_MODEL), full2),     # head masks
            pl.BlockSpec((1, D_MODEL), full2),           # sa gamma
            pl.BlockSpec((1, D_MODEL), full2),           # sa beta
            pl.BlockSpec((D_MODEL, D_MODEL), full2),     # Wq
            pl.BlockSpec((D_MODEL, D_MODEL), full2),     # Wq @ ROT
            pl.BlockSpec((D_MODEL, D_MODEL), full2),     # Wk
            pl.BlockSpec((D_MODEL, D_MODEL), full2),     # Wk @ ROT
            pl.BlockSpec((D_MODEL, D_MODEL), full2),     # Wv
            pl.BlockSpec((D_MODEL, D_MODEL), full2),     # Wo
            pl.BlockSpec((1, D_MODEL), full2),           # md gamma
            pl.BlockSpec((1, D_MODEL), full2),           # md beta
            pl.BlockSpec((D_MODEL, NH_LP * 2), full2),   # md offset proj
            pl.BlockSpec((D_MODEL, NH_LP), full2),       # md attention-weight proj
            pl.BlockSpec((N_HEADS, NH_LP), full2),       # -inf group mask
        ],
        out_specs=(pl.BlockSpec((TQ, D_MODEL), row),
                   pl.BlockSpec((TQ, NH_LP * 2), row),
                   pl.BlockSpec((TQ, N_HEADS, NH_LP), row3)),
        compiler_params=cparams,
    )(q_pad, q_pad, bic, bir, umask, qcos, qsin, qcos, qsin, hm32,
      params["sa_gamma"], params["sa_beta"], wq, wq_rot, wk, wk_rot, wv, params["sa_wo"],
      params["md_gamma"], params["md_beta"], params["md_woff"], params["md_wattw"], negblk)

    # ---------- XLA glue: data-dependent gathers (deformable bilinear + neighborhood) ----------
    offsets = off.reshape(Np, N_HEADS, N_LEVELS, N_POINTS, 2)
    p_norm = pos_pad / jnp.array([Hmax, Wmax], jnp.float32)
    sampled_levels = []
    for l, (Hl, Wl) in enumerate(level_shapes):
        wh = jnp.array([Hl, Wl], jnp.float32)
        loc = p_norm[:, None, None, :] + offsets[:, :, l] / wh       # (Np, H, P, 2) normalized
        yx = loc * wh - 0.5                                          # level pixel coords
        sampled_levels.append(
            _bilinear_sample_raw(stacked_feature_maps[:, l], bi_gather, yx, Hl, Wl))
    sampled = jnp.stack(sampled_levels, axis=2)                      # (Np, H, L, P, D)
    sampled = sampled.reshape(Np, NH_LP, D_MODEL)                    # raw features, head-major

    nb_feat, nb_pos, nb_valid = _gather_neighborhood(
        stacked_feature_maps, bi_gather, pos_pad, level_shapes,
        NEIGHBORHOOD_SIZES, Hmax, Wmax)
    K = nb_feat.shape[1]
    kcos, ksin = _rope_tables(nb_pos)                                # (Np, K, D_MODEL)
    nb_mask = jnp.where(nb_valid, 0.0, NEG_INF).astype(jnp.float32)

    # ---------- kernel B: deformable combine + neighborhood attention + FFN ----------
    out = pl.pallas_call(
        _msdeform_na_ffn_kernel,
        grid=grid,
        out_shape=jax.ShapeDtypeStruct((Np, D_MODEL), jnp.float32),
        in_specs=[
            pl.BlockSpec((TQ, D_MODEL), row),                    # x (post self-attn)
            pl.BlockSpec((TQ, N_HEADS, NH_LP), row3),            # deformable attw (head-masked)
            pl.BlockSpec((TQ, NH_LP, D_MODEL), row3),            # sampled raw features
            pl.BlockSpec((N_HEADS, D_MODEL, D_MODEL), full3),    # folded md value@out proj
            pl.BlockSpec((1, D_MODEL), full2),                   # na gamma
            pl.BlockSpec((1, D_MODEL), full2),                   # na beta
            pl.BlockSpec((D_MODEL, D_MODEL), full2),             # na Wq
            pl.BlockSpec((D_MODEL, D_MODEL), full2),             # na Wq @ ROT
            pl.BlockSpec((D_MODEL, D_MODEL), full2),             # na Wk
            pl.BlockSpec((D_MODEL, D_MODEL), full2),             # na Wk @ ROT
            pl.BlockSpec((N_HEADS, D_MODEL), full2),             # head masks
            pl.BlockSpec((N_HEADS, D_MODEL, D_MODEL), full3),    # folded na value@out proj
            pl.BlockSpec((TQ, D_MODEL), row),                    # query RoPE cos
            pl.BlockSpec((TQ, D_MODEL), row),                    # query RoPE sin
            pl.BlockSpec((TQ, K, D_MODEL), row3),                # neighborhood raw features
            pl.BlockSpec((TQ, K, D_MODEL), row3),                # key RoPE cos
            pl.BlockSpec((TQ, K, D_MODEL), row3),                # key RoPE sin
            pl.BlockSpec((TQ, K), row),                          # neighborhood validity mask
            pl.BlockSpec((1, D_MODEL), full2),                   # ffn gamma
            pl.BlockSpec((1, D_MODEL), full2),                   # ffn beta
            pl.BlockSpec((D_MODEL, DIM_FFN), full2),             # ffn w1
            pl.BlockSpec((1, DIM_FFN), full2),                   # ffn b1
            pl.BlockSpec((DIM_FFN, D_MODEL), full2),             # ffn w2
            pl.BlockSpec((1, D_MODEL), full2),                   # ffn b2
        ],
        out_specs=pl.BlockSpec((TQ, D_MODEL), row),
        compiler_params=cparams,
    )(x1, attw, sampled, mmd,
      params["na_gamma"], params["na_beta"], params["na_wq"], na_wq_rot,
      params["na_wk"], na_wk_rot, hm32, mna,
      qcos, qsin, nb_feat, kcos, ksin, nb_mask,
      params["ffn_gamma"], params["ffn_beta"], params["ffn_w1"], params["ffn_b1"],
      params["ffn_w2"], params["ffn_b2"])

    return out[:N]


# -------------------- demo --------------------
if __name__ == "__main__":
    key = jax.random.PRNGKey(0)
    k_q, k_pos, k_feat, k_param = jax.random.split(key, 4)

    B = 2
    N_QUERIES = 8                      # 4 queries per batch element
    level_spatial_shapes = jnp.array([[2, 2], [4, 4], [8, 8], [16, 16]], jnp.int32)
    Hmax, Wmax = 16, 16

    queries = jax.random.normal(k_q, (N_QUERIES, D_MODEL), jnp.float32)
    query_batch_offsets = jnp.array([0, 4, 8], jnp.int32)
    query_spatial_positions = jax.random.uniform(
        k_pos, (N_QUERIES, 2), jnp.float32, minval=0.5, maxval=15.5)

    # dense stacked feature maps, zero-padded outside each level's valid region
    feat = jax.random.normal(k_feat, (B, N_LEVELS, Hmax, Wmax, D_MODEL), jnp.float32)
    ii = jnp.arange(Hmax)[None, :, None]
    jj = jnp.arange(Wmax)[None, None, :]
    hs = level_spatial_shapes[:, 0][:, None, None]
    ws = level_spatial_shapes[:, 1][:, None, None]
    level_valid = (ii < hs) & (jj < ws)                              # (L, Hmax, Wmax)
    stacked_feature_maps = feat * level_valid[None, :, :, :, None].astype(jnp.float32)

    params = init_params(k_param)

    out = transformer_decoder_layer_forward(
        params, queries, query_batch_offsets, query_spatial_positions,
        stacked_feature_maps, level_spatial_shapes,
        attn_mask=None, background_embedding=None)
    out = jax.block_until_ready(out)

    assert out.shape == (N_QUERIES, D_MODEL)
    assert bool(jnp.all(jnp.isfinite(out)))
    print("KERNEL_OK")
</pallas_src>

<mosaic_0001>
module attributes {stable_mosaic.version = 11 : i64} {
  func.func @_self_attn_msdeform_pre_kernel(%arg0: i32, %arg1: memref<8x32xf32, #tpu.memory_space<vmem>>, %arg2: memref<8x32xf32, #tpu.memory_space<vmem>>, %arg3: memref<8x1xi32, #tpu.memory_space<vmem>>, %arg4: memref<1x8xi32, #tpu.memory_space<vmem>>, %arg5: memref<1x8xf32, #tpu.memory_space<vmem>>, %arg6: memref<8x32xf32, #tpu.memory_space<vmem>>, %arg7: memref<8x32xf32, #tpu.memory_space<vmem>>, %arg8: memref<8x32xf32, #tpu.memory_space<vmem>>, %arg9: memref<8x32xf32, #tpu.memory_space<vmem>>, %arg10: memref<4x32xf32, #tpu.memory_space<vmem>>, %arg11: memref<1x32xf32, #tpu.memory_space<vmem>>, %arg12: memref<1x32xf32, #tpu.memory_space<vmem>>, %arg13: memref<32x32xf32, #tpu.memory_space<vmem>>, %arg14: memref<32x32xf32, #tpu.memory_space<vmem>>, %arg15: memref<32x32xf32, #tpu.memory_space<vmem>>, %arg16: memref<32x32xf32, #tpu.memory_space<vmem>>, %arg17: memref<32x32xf32, #tpu.memory_space<vmem>>, %arg18: memref<32x32xf32, #tpu.memory_space<vmem>>, %arg19: memref<1x32xf32, #tpu.memory_space<vmem>>, %arg20: memref<1x32xf32, #tpu.memory_space<vmem>>, %arg21: memref<32x128xf32, #tpu.memory_space<vmem>>, %arg22: memref<32x64xf32, #tpu.memory_space<vmem>>, %arg23: memref<4x64xf32, #tpu.memory_space<vmem>>, %arg24: memref<8x32xf32, #tpu.memory_space<vmem>>, %arg25: memref<8x128xf32, #tpu.memory_space<vmem>>, %arg26: memref<8x4x64xf32, #tpu.memory_space<vmem>>) attributes {dimension_semantics = [#tpu.dimension_semantics<parallel>], iteration_bounds = array<i64: 1>, scalar_prefetch = 0 : i64, scratch_operands = 0 : i64, tpu.core_type = #tpu.core_type<tc>, window_params = [{transform_indices = @transform_0, window_bounds = array<i64: 8, 32>}, {pipeline_mode = #tpu.pipeline_mode<synchronous>, transform_indices = @transform_1, window_bounds = array<i64: 8, 32>}, {transform_indices = @transform_2, window_bounds = array<i64: 8, 1>}, {pipeline_mode = #tpu.pipeline_mode<synchronous>, transform_indices = @transform_3, window_bounds = array<i64: 1, 8>}, {pipeline_mode = #tpu.pipeline_mode<synchronous>, transform_indices = @transform_4, window_bounds = array<i64: 1, 8>}, {transform_indices = @transform_5, window_bounds = array<i64: 8, 32>}, {transform_indices = @transform_6, window_bounds = array<i64: 8, 32>}, {pipeline_mode = #tpu.pipeline_mode<synchronous>, transform_indices = @transform_7, window_bounds = array<i64: 8, 32>}, {pipeline_mode = #tpu.pipeline_mode<synchronous>, transform_indices = @transform_8, window_bounds = array<i64: 8, 32>}, {pipeline_mode = #tpu.pipeline_mode<synchronous>, transform_indices = @transform_9, window_bounds = array<i64: 4, 32>}, {pipeline_mode = #tpu.pipeline_mode<synchronous>, transform_indices = @transform_10, window_bounds = array<i64: 1, 32>}, {pipeline_mode = #tpu.pipeline_mode<synchronous>, transform_indices = @transform_11, window_bounds = array<i64: 1, 32>}, {pipeline_mode = #tpu.pipeline_mode<synchronous>, transform_indices = @transform_12, window_bounds = array<i64: 32, 32>}, {pipeline_mode = #tpu.pipeline_mode<synchronous>, transform_indices = @transform_13, window_bounds = array<i64: 32, 32>}, {pipeline_mode = #tpu.pipeline_mode<synchronous>, transform_indices = @transform_14, window_bounds = array<i64: 32, 32>}, {pipeline_mode = #tpu.pipeline_mode<synchronous>, transform_indices = @transform_15, window_bounds = array<i64: 32, 32>}, {pipeline_mode = #tpu.pipeline_mode<synchronous>, transform_indices = @transform_16, window_bounds = array<i64: 32, 32>}, {pipeline_mode = #tpu.pipeline_mode<synchronous>, transform_indices = @transform_17, window_bounds = array<i64: 32, 32>}, {pipeline_mode = #tpu.pipeline_mode<synchronous>, transform_indices = @transform_18, window_bounds = array<i64: 1, 32>}, {pipeline_mode = #tpu.pipeline_mode<synchronous>, transform_indices = @transform_19, window_bounds = array<i64: 1, 32>}, {pipeline_mode = #tpu.pipeline_mode<synchronous>, transform_indices = @transform_20, window_bounds = array<i64: 32, 128>}, {pipeline_mode = #tpu.pipeline_mode<synchronous>, transform_indices = @transform_21, window_bounds = array<i64: 32, 64>}, {pipeline_mode = #tpu.pipeline_mode<synchronous>, transform_indices = @transform_22, window_bounds = array<i64: 4, 64>}, {transform_indices = @transform_23, window_bounds = array<i64: 8, 32>}, {transform_indices = @transform_24, window_bounds = array<i64: 8, 128>}, {transform_indices = @transform_25, window_bounds = array<i64: 8, 4, 64>}]} {
    %c0 = arith.constant 0 : index
    %c0_0 = arith.constant 0 : index
    %0 = vector.load %arg1[%c0, %c0_0] : memref<8x32xf32, #tpu.memory_space<vmem>>, vector<8x32xf32>
    %c0_1 = arith.constant 0 : index
    %c0_2 = arith.constant 0 : index
    %1 = vector.load %arg2[%c0_1, %c0_2] : memref<8x32xf32, #tpu.memory_space<vmem>>, vector<8x32xf32>
    %c0_3 = arith.constant 0 : index
    %c0_4 = arith.constant 0 : index
    %2 = vector.load %arg11[%c0_3, %c0_4] : memref<1x32xf32, #tpu.memory_space<vmem>>, vector<1x32xf32>
    %c0_5 = arith.constant 0 : index
    %c0_6 = arith.constant 0 : index
    %3 = vector.load %arg12[%c0_5, %c0_6] : memref<1x32xf32, #tpu.memory_space<vmem>>, vector<1x32xf32>
    %cst = arith.constant dense<0.000000e+00> : vector<8xf32>
    %4 = vector.multi_reduction <add>, %0, %cst [1] : vector<8x32xf32> to vector<8xf32>
    %5 = vector.shape_cast %4 : vector<8xf32> to vector<8x1xf32>
    %cst_7 = arith.constant 3.200000e+01 : f32
    %6 = vector.broadcast %cst_7 : f32 to vector<8x1xf32>
    %7 = arith.divf %5, %6 : vector<8x1xf32>
    %8 = vector.broadcast %7 : vector<8x1xf32> to vector<8x32xf32>
    %9 = arith.subf %0, %8 : vector<8x32xf32>
    %10 = arith.mulf %9, %9 : vector<8x32xf32>
    %cst_8 = arith.constant dense<0.000000e+00> : vector<8xf32>
    %11 = vector.multi_reduction <add>, %10, %cst_8 [1] : vector<8x32xf32> to vector<8xf32>
    %12 = vector.shape_cast %11 : vector<8xf32> to vector<8x1xf32>
    %cst_9 = arith.constant 3.200000e+01 : f32
    %13 = vector.broadcast %cst_9 : f32 to vector<8x1xf32>
    %14 = arith.divf %12, %13 : vector<8x1xf32>
    %15 = vector.broadcast %7 : vector<8x1xf32> to vector<8x32xf32>
    %16 = arith.subf %0, %15 : vector<8x32xf32>
    %cst_10 = arith.constant 9.99999974E-6 : f32
    %17 = vector.broadcast %cst_10 : f32 to vector<8x1xf32>
    %18 = arith.addf %14, %17 : vector<8x1xf32>
    %19 = math.rsqrt %18 : vector<8x1xf32>
    %20 = vector.broadcast %19 : vector<8x1xf32> to vector<8x32xf32>
    %21 = arith.mulf %16, %20 : vector<8x32xf32>
    %22 = vector.broadcast %2 : vector<1x32xf32> to vector<8x32xf32>
    %23 = arith.mulf %21, %22 : vector<8x32xf32>
    %24 = vector.broadcast %3 : vector<1x32xf32> to vector<8x32xf32>
    %25 = arith.addf %23, %24 : vector<8x32xf32>
    %cst_11 = arith.constant dense<0.000000e+00> : vector<8xf32>
    %26 = vector.multi_reduction <add>, %1, %cst_11 [1] : vector<8x32xf32> to vector<8xf32>
    %27 = vector.shape_cast %26 : vector<8xf32> to vector<8x1xf32>
    %cst_12 = arith.constant 3.200000e+01 : f32
    %28 = vector.broadcast %cst_12 : f32 to vector<8x1xf32>
    %29 = arith.divf %27, %28 : vector<8x1xf32>
    %30 = vector.broadcast %29 : vector<8x1xf32> to vector<8x32xf32>
    %31 = arith.subf %1, %30 : vector<8x32xf32>
    %32 = arith.mulf %31, %31 : vector<8x32xf32>
    %cst_13 = arith.constant dense<0.000000e+00> : vector<8xf32>
    %33 = vector.multi_reduction <add>, %32, %cst_13 [1] : vector<8x32xf32> to vector<8xf32>
    %34 = vector.shape_cast %33 : vector<8xf32> to vector<8x1xf32>
    %cst_14 = arith.constant 3.200000e+01 : f32
    %35 = vector.broadcast %cst_14 : f32 to vector<8x1xf32>
    %36 = arith.divf %34, %35 : vector<8x1xf32>
    %37 = vector.broadcast %29 : vector<8x1xf32> to vector<8x32xf32>
    %38 = arith.subf %1, %37 : vector<8x32xf32>
    %cst_15 = arith.constant 9.99999974E-6 : f32
    %39 = vector.broadcast %cst_15 : f32 to vector<8x1xf32>
    %40 = arith.addf %36, %39 : vector<8x1xf32>
    %41 = math.rsqrt %40 : vector<8x1xf32>
    %42 = vector.broadcast %41 : vector<8x1xf32> to vector<8x32xf32>
    %43 = arith.mulf %38, %42 : vector<8x32xf32>
    %44 = vector.broadcast %2 : vector<1x32xf32> to vector<8x32xf32>
    %45 = arith.mulf %43, %44 : vector<8x32xf32>
    %46 = vector.broadcast %3 : vector<1x32xf32> to vector<8x32xf32>
    %47 = arith.addf %45, %46 : vector<8x32xf32>
    %c0_16 = arith.constant 0 : index
    %c0_17 = arith.constant 0 : index
    %48 = vector.load %arg13[%c0_16, %c0_17] : memref<32x32xf32, #tpu.memory_space<vmem>>, vector<32x32xf32>
    %cst_18 = arith.constant dense<0.000000e+00> : vector<8x32xf32>
    %49 = tpu.matmul %25, %48, %cst_18 {dimension_numbers = #tpu.dot_dimension_numbers<[1], [0], [0], [1], [0, 0, 1, 1], [], []>} : vector<8x32xf32>, vector<32x32xf32>, vector<8x32xf32> -> vector<8x32xf32>
    %c0_19 = arith.constant 0 : index
    %c0_20 = arith.constant 0 : index
    %50 = vector.load %arg14[%c0_19, %c0_20] : memref<32x32xf32, #tpu.memory_space<vmem>>, vector<32x32xf32>
    %cst_21 = arith.constant dense<0.000000e+00> : vector<8x32xf32>
    %51 = tpu.matmul %25, %50, %cst_21 {dimension_numbers = #tpu.dot_dimension_numbers<[1], [0], [0], [1], [0, 0, 1, 1], [], []>} : vector<8x32xf32>, vector<32x32xf32>, vector<8x32xf32> -> vector<8x32xf32>
    %c0_22 = arith.constant 0 : index
    %c0_23 = arith.constant 0 : index
    %52 = vector.load %arg15[%c0_22, %c0_23] : memref<32x32xf32, #tpu.memory_space<vmem>>, vector<32x32xf32>
    %cst_24 = arith.constant dense<0.000000e+00> : vector<8x32xf32>
    %53 = tpu.matmul %47, %52, %cst_24 {dimension_numbers = #tpu.dot_dimension_numbers<[1], [0], [0], [1], [0, 0, 1, 1], [], []>} : vector<8x32xf32>, vector<32x32xf32>, vector<8x32xf32> -> vector<8x32xf32>
    %c0_25 = arith.constant 0 : index
    %c0_26 = arith.constant 0 : index
    %54 = vector.load %arg16[%c0_25, %c0_26] : memref<32x32xf32, #tpu.memory_space<vmem>>, vector<32x32xf32>
    %cst_27 = arith.constant dense<0.000000e+00> : vector<8x32xf32>
    %55 = tpu.matmul %47, %54, %cst_27 {dimension_numbers = #tpu.dot_dimension_numbers<[1], [0], [0], [1], [0, 0, 1, 1], [], []>} : vector<8x32xf32>, vector<32x32xf32>, vector<8x32xf32> -> vector<8x32xf32>
    %c0_28 = arith.constant 0 : index
    %c0_29 = arith.constant 0 : index
    %56 = vector.load %arg17[%c0_28, %c0_29] : memref<32x32xf32, #tpu.memory_space<vmem>>, vector<32x32xf32>
    %cst_30 = arith.constant dense<0.000000e+00> : vector<8x32xf32>
    %57 = tpu.matmul %47, %56, %cst_30 {dimension_numbers = #tpu.dot_dimension_numbers<[1], [0], [0], [1], [0, 0, 1, 1], [], []>} : vector<8x32xf32>, vector<32x32xf32>, vector<8x32xf32> -> vector<8x32xf32>
    %c0_31 = arith.constant 0 : index
    %c0_32 = arith.constant 0 : index
    %58 = vector.load %arg6[%c0_31, %c0_32] : memref<8x32xf32, #tpu.memory_space<vmem>>, vector<8x32xf32>
    %59 = arith.mulf %49, %58 : vector<8x32xf32>
    %c0_33 = arith.constant 0 : index
    %c0_34 = arith.constant 0 : index
    %60 = vector.load %arg7[%c0_33, %c0_34] : memref<8x32xf32, #tpu.memory_space<vmem>>, vector<8x32xf32>
    %61 = arith.mulf %51, %60 : vector<8x32xf32>
    %62 = arith.addf %59, %61 : vector<8x32xf32>
    %c0_35 = arith.constant 0 : index
    %c0_36 = arith.constant 0 : index
    %63 = vector.load %arg8[%c0_35, %c0_36] : memref<8x32xf32, #tpu.memory_space<vmem>>, vector<8x32xf32>
    %64 = arith.mulf %53, %63 : vector<8x32xf32>
    %c0_37 = arith.constant 0 : index
    %c0_38 = arith.constant 0 : index
    %65 = vector.load %arg9[%c0_37, %c0_38] : memref<8x32xf32, #tpu.memory_space<vmem>>, vector<8x32xf32>
    %66 = arith.mulf %55, %65 : vector<8x32xf32>
    %67 = arith.addf %64, %66 : vector<8x32xf32>
    %c0_39 = arith.constant 0 : index
    %c0_40 = arith.constant 0 : index
    %68 = vector.load %arg10[%c0_39, %c0_40] : memref<4x32xf32, #tpu.memory_space<vmem>>, vector<4x32xf32>
    %69 = vector.shape_cast %68 : vector<4x32xf32> to vector<4x1x32xf32>
    %70 = vector.shape_cast %62 : vector<8x32xf32> to vector<1x8x32xf32>
    %71 = vector.broadcast %69 : vector<4x1x32xf32> to vector<4x8x32xf32>
    %72 = vector.broadcast %70 : vector<1x8x32xf32> to vector<4x8x32xf32>
    %73 = arith.mulf %71, %72 : vector<4x8x32xf32>
    %74 = vector.shape_cast %67 : vector<8x32xf32> to vector<1x8x32xf32>
    %75 = vector.shape_cast %74 : vector<1x8x32xf32> to vector<1x8x32xf32>
    %76 = vector.broadcast %75 : vector<1x8x32xf32> to vector<4x8x32xf32>
    %77 = vector.shape_cast %68 : vector<4x32xf32> to vector<4x1x32xf32>
    %78 = vector.shape_cast %57 : vector<8x32xf32> to vector<1x8x32xf32>
    %79 = vector.broadcast %77 : vector<4x1x32xf32> to vector<4x8x32xf32>
    %80 = vector.broadcast %78 : vector<1x8x32xf32> to vector<4x8x32xf32>
    %81 = arith.mulf %79, %80 : vector<4x8x32xf32>
    "tpu.trace_start"() <{level = 10 : i32, message = "hnd,hmd->hnm"}> : () -> ()
    %cst_41 = arith.constant dense<0.000000e+00> : vector<4x8x8xf32>
    %82 = tpu.matmul %73, %76, %cst_41 {dimension_numbers = #tpu.dot_dimension_numbers<[2], [2], [1], [1], [0, 0, 0, 1, 1, 1], [0], [0]>} : vector<4x8x32xf32>, vector<4x8x32xf32>, vector<4x8x8xf32> -> vector<4x8x8xf32>
    "tpu.trace_stop"() : () -> ()
    %cst_42 = arith.constant 0.353553385 : f32
    %83 = vector.broadcast %cst_42 : f32 to vector<4x8x8xf32>
    %84 = arith.mulf %82, %83 : vector<4x8x8xf32>
    %c0_43 = arith.constant 0 : index
    %c0_44 = arith.constant 0 : index
    %85 = vector.load %arg3[%c0_43, %c0_44] : memref<8x1xi32, #tpu.memory_space<vmem>>, vector<8x1xi32>
    %c0_45 = arith.constant 0 : index
    %c0_46 = arith.constant 0 : index
    %86 = vector.load %arg4[%c0_45, %c0_46] : memref<1x8xi32, #tpu.memory_space<vmem>>, vector<1x8xi32>
    %87 = vector.broadcast %85 : vector<8x1xi32> to vector<8x8xi32>
    %88 = vector.broadcast %86 : vector<1x8xi32> to vector<8x8xi32>
    %89 = arith.cmpi eq, %87, %88 : vector<8x8xi32>
    %cst_47 = arith.constant 0.000000e+00 : f32
    %cst_48 = arith.constant -1.000000e+09 : f32
    %90 = vector.broadcast %cst_47 : f32 to vector<8x8xf32>
    %91 = vector.broadcast %cst_48 : f32 to vector<8x8xf32>
    %92 = arith.select %89, %90, %91 : vector<8x8xi1>, vector<8x8xf32>
    %93 = vector.shape_cast %92 : vector<8x8xf32> to vector<1x8x8xf32>
    %94 = vector.broadcast %93 : vector<1x8x8xf32> to vector<4x8x8xf32>
    %95 = arith.addf %84, %94 : vector<4x8x8xf32>
    %c0_49 = arith.constant 0 : index
    %c0_50 = arith.constant 0 : index
    %96 = vector.load %arg5[%c0_49, %c0_50] : memref<1x8xf32, #tpu.memory_space<vmem>>, vector<1x8xf32>
    %97 = vector.shape_cast %96 : vector<1x8xf32> to vector<1x1x8xf32>
    %98 = vector.broadcast %97 : vector<1x1x8xf32> to vector<4x8x8xf32>
    %99 = arith.addf %95, %98 : vector<4x8x8xf32>
    %cst_51 = arith.constant dense<0xFF800000> : vector<4x8xf32>
    %100 = vector.multi_reduction <maximumf>, %99, %cst_51 [2] : vector<4x8x8xf32> to vector<4x8xf32>
    %101 = vector.shape_cast %100 : vector<4x8xf32> to vector<4x8x1xf32>
    %102 = vector.broadcast %101 : vector<4x8x1xf32> to vector<4x8x8xf32>
    %103 = arith.subf %99, %102 : vector<4x8x8xf32>
    %104 = math.exp %103 : vector<4x8x8xf32>
    %cst_52 = arith.constant dense<0.000000e+00> : vector<4x8xf32>
    %105 = vector.multi_reduction <add>, %104, %cst_52 [2] : vector<4x8x8xf32> to vector<4x8xf32>
    %106 = vector.shape_cast %105 : vector<4x8xf32> to vector<4x8x1xf32>
    %107 = tpu.reciprocal %106 {approx = true} : vector<4x8x1xf32> -> vector<4x8x1xf32>
    %108 = vector.broadcast %107 : vector<4x8x1xf32> to vector<4x8x8xf32>
    %109 = arith.mulf %104, %108 : vector<4x8x8xf32>
    "tpu.trace_start"() <{level = 10 : i32, message = "hnm,hmd->hnd"}> : () -> ()
    %cst_53 = arith.constant dense<0.000000e+00> : vector<4x8x32xf32>
    %110 = tpu.matmul %109, %81, %cst_53 {dimension_numbers = #tpu.dot_dimension_numbers<[2], [1], [1], [2], [0, 0, 0, 1, 1, 2], [0], [0]>} : vector<4x8x8xf32>, vector<4x8x32xf32>, vector<4x8x32xf32> -> vector<4x8x32xf32>
    "tpu.trace_stop"() : () -> ()
    %cst_54 = arith.constant dense<0.000000e+00> : vector<8x32xf32>
    %111 = vector.multi_reduction <add>, %110, %cst_54 [0] : vector<4x8x32xf32> to vector<8x32xf32>
    %c0_55 = arith.constant 0 : index
    %c0_56 = arith.constant 0 : index
    %112 = vector.load %arg18[%c0_55, %c0_56] : memref<32x32xf32, #tpu.memory_space<vmem>>, vector<32x32xf32>
    %cst_57 = arith.constant dense<0.000000e+00> : vector<8x32xf32>
    %113 = tpu.matmul %111, %112, %cst_57 {dimension_numbers = #tpu.dot_dimension_numbers<[1], [0], [0], [1], [0, 0, 1, 1], [], []>} : vector<8x32xf32>, vector<32x32xf32>, vector<8x32xf32> -> vector<8x32xf32>
    %114 = arith.addf %0, %113 : vector<8x32xf32>
    %c0_58 = arith.constant 0 : index
    %c0_59 = arith.constant 0 : index
    %115 = vector.load %arg24[%c0_58, %c0_59] : memref<8x32xf32, #tpu.memory_space<vmem>>, vector<8x32xf32>
    tpu.vector_store %arg24[%c0_58, %c0_59], %114 {strides = array<i32>} : memref<8x32xf32, #tpu.memory_space<vmem>>, vector<8x32xf32>,
    %c0_60 = arith.constant 0 : index
    %c0_61 = arith.constant 0 : index
    %116 = vector.load %arg19[%c0_60, %c0_61] : memref<1x32xf32, #tpu.memory_space<vmem>>, vector<1x32xf32>
    %c0_62 = arith.constant 0 : index
    %c0_63 = arith.constant 0 : index
    %117 = vector.load %arg20[%c0_62, %c0_63] : memref<1x32xf32, #tpu.memory_space<vmem>>, vector<1x32xf32>
    %cst_64 = arith.constant dense<0.000000e+00> : vector<8xf32>
    %118 = vector.multi_reduction <add>, %114, %cst_64 [1] : vector<8x32xf32> to vector<8xf32>
    %119 = vector.shape_cast %118 : vector<8xf32> to vector<8x1xf32>
    %cst_65 = arith.constant 3.200000e+01 : f32
    %120 = vector.broadcast %cst_65 : f32 to vector<8x1xf32>
    %121 = arith.divf %119, %120 : vector<8x1xf32>
    %122 = vector.broadcast %121 : vector<8x1xf32> to vector<8x32xf32>
    %123 = arith.subf %114, %122 : vector<8x32xf32>
    %124 = arith.mulf %123, %123 : vector<8x32xf32>
    %cst_66 = arith.constant dense<0.000000e+00> : vector<8xf32>
    %125 = vector.multi_reduction <add>, %124, %cst_66 [1] : vector<8x32xf32> to vector<8xf32>
    %126 = vector.shape_cast %125 : vector<8xf32> to vector<8x1xf32>
    %cst_67 = arith.constant 3.200000e+01 : f32
    %127 = vector.broadcast %cst_67 : f32 to vector<8x1xf32>
    %128 = arith.divf %126, %127 : vector<8x1xf32>
    %129 = vector.broadcast %121 : vector<8x1xf32> to vector<8x32xf32>
    %130 = arith.subf %114, %129 : vector<8x32xf32>
    %cst_68 = arith.constant 9.99999974E-6 : f32
    %131 = vector.broadcast %cst_68 : f32 to vector<8x1xf32>
    %132 = arith.addf %128, %131 : vector<8x1xf32>
    %133 = math.rsqrt %132 : vector<8x1xf32>
    %134 = vector.broadcast %133 : vector<8x1xf32> to vector<8x32xf32>
    %135 = arith.mulf %130, %134 : vector<8x32xf32>
    %136 = vector.broadcast %116 : vector<1x32xf32> to vector<8x32xf32>
    %137 = arith.mulf %135, %136 : vector<8x32xf32>
    %138 = vector.broadcast %117 : vector<1x32xf32> to vector<8x32xf32>
    %139 = arith.addf %137, %138 : vector<8x32xf32>
    %c0_69 = arith.constant 0 : index
    %c0_70 = arith.constant 0 : index
    %140 = vector.load %arg21[%c0_69, %c0_70] : memref<32x128xf32, #tpu.memory_space<vmem>>, vector<32x128xf32>
    %cst_71 = arith.constant dense<0.000000e+00> : vector<8x128xf32>
    %141 = tpu.matmul %139, %140, %cst_71 {dimension_numbers = #tpu.dot_dimension_numbers<[1], [0], [0], [1], [0, 0, 1, 1], [], []>} : vector<8x32xf32>, vector<32x128xf32>, vector<8x128xf32> -> vector<8x128xf32>
    %c0_72 = arith.constant 0 : index
    %c0_73 = arith.constant 0 : index
    %142 = vector.load %arg25[%c0_72, %c0_73] : memref<8x128xf32, #tpu.memory_space<vmem>>, vector<8x128xf32>
    tpu.vector_store %arg25[%c0_72, %c0_73], %141 {strides = array<i32>} : memref<8x128xf32, #tpu.memory_space<vmem>>, vector<8x128xf32>,
    %c0_74 = arith.constant 0 : index
    %c0_75 = arith.constant 0 : index
    %143 = vector.load %arg22[%c0_74, %c0_75] : memref<32x64xf32, #tpu.memory_space<vmem>>, vector<32x64xf32>
    %cst_76 = arith.constant dense<0.000000e+00> : vector<8x64xf32>
    %144 = tpu.matmul %139, %143, %cst_76 {dimension_numbers = #tpu.dot_dimension_numbers<[1], [0], [0], [1], [0, 0, 1, 1], [], []>} : vector<8x32xf32>, vector<32x64xf32>, vector<8x64xf32> -> vector<8x64xf32>
    %145 = vector.shape_cast %144 : vector<8x64xf32> to vector<8x1x64xf32>
    %c0_77 = arith.constant 0 : index
    %c0_78 = arith.constant 0 : index
    %146 = vector.load %arg23[%c0_77, %c0_78] : memref<4x64xf32, #tpu.memory_space<vmem>>, vector<4x64xf32>
    %147 = vector.shape_cast %146 : vector<4x64xf32> to vector<1x4x64xf32>
    %148 = vector.broadcast %145 : vector<8x1x64xf32> to vector<8x4x64xf32>
    %149 = vector.broadcast %147 : vector<1x4x64xf32> to vector<8x4x64xf32>
    %150 = arith.addf %148, %149 : vector<8x4x64xf32>
    %cst_79 = arith.constant dense<0xFF800000> : vector<8x4xf32>
    %151 = vector.multi_reduction <maximumf>, %150, %cst_79 [2] : vector<8x4x64xf32> to vector<8x4xf32>
    %152 = vector.shape_cast %151 : vector<8x4xf32> to vector<8x4x1xf32>
    %153 = vector.broadcast %152 : vector<8x4x1xf32> to vector<8x4x64xf32>
    %154 = arith.subf %150, %153 : vector<8x4x64xf32>
    %155 = math.exp %154 : vector<8x4x64xf32>
    %cst_80 = arith.constant dense<0.000000e+00> : vector<8x4xf32>
    %156 = vector.multi_reduction <add>, %155, %cst_80 [2] : vector<8x4x64xf32> to vector<8x4xf32>
    %157 = vector.shape_cast %156 : vector<8x4xf32> to vector<8x4x1xf32>
    %158 = tpu.reciprocal %157 {approx = true} : vector<8x4x1xf32> -> vector<8x4x1xf32>
    %159 = vector.broadcast %158 : vector<8x4x1xf32> to vector<8x4x64xf32>
    %160 = arith.mulf %155, %159 : vector<8x4x64xf32>
    %c0_81 = arith.constant 0 : index
    %c0_82 = arith.constant 0 : index
    %c0_83 = arith.constant 0 : index
    %161 = vector.load %arg26[%c0_81, %c0_82, %c0_83] : memref<8x4x64xf32, #tpu.memory_space<vmem>>, vector<8x4x64xf32>
    tpu.vector_store %arg26[%c0_81, %c0_82, %c0_83], %160 {strides = array<i32>} : memref<8x4x64xf32, #tpu.memory_space<vmem>>, vector<8x4x64xf32>,
    return
  }
  func.func @transform_0(%arg0: i32) -> (i32, i32) {
    %c0_i32 = arith.constant 0 : i32
    %c0_i32_0 = arith.constant 0 : i32
    return %arg0, %c0_i32 : i32, i32
  }
  func.func @transform_1(%arg0: i32) -> (i32, i32) {
    %c0_i32 = arith.constant 0 : i32
    %c0_i32_0 = arith.constant 0 : i32
    %c0_i32_1 = arith.constant 0 : i32
    return %c0_i32, %c0_i32_0 : i32, i32
  }
  func.func @transform_2(%arg0: i32) -> (i32, i32) {
    %c0_i32 = arith.constant 0 : i32
    %c0_i32_0 = arith.constant 0 : i32
    return %arg0, %c0_i32 : i32, i32
  }
  func.func @transform_3(%arg0: i32) -> (i32, i32) {
    %c0_i32 = arith.constant 0 : i32
    %c0_i32_0 = arith.constant 0 : i32
    %c0_i32_1 = arith.constant 0 : i32
    return %c0_i32, %c0_i32_0 : i32, i32
  }
  func.func @transform_4(%arg0: i32) -> (i32, i32) {
    %c0_i32 = arith.constant 0 : i32
    %c0_i32_0 = arith.constant 0 : i32
    %c0_i32_1 = arith.constant 0 : i32
    return %c0_i32, %c0_i32_0 : i32, i32
  }
  func.func @transform_5(%arg0: i32) -> (i32, i32) {
    %c0_i32 = arith.constant 0 : i32
    %c0_i32_0 = arith.constant 0 : i32
    return %arg0, %c0_i32 : i32, i32
  }
  func.func @transform_6(%arg0: i32) -> (i32, i32) {
    %c0_i32 = arith.constant 0 : i32
    %c0_i32_0 = arith.constant 0 : i32
    return %arg0, %c0_i32 : i32, i32
  }
  func.func @transform_7(%arg0: i32) -> (i32, i32) {
    %c0_i32 = arith.constant 0 : i32
    %c0_i32_0 = arith.constant 0 : i32
    %c0_i32_1 = arith.constant 0 : i32
    return %c0_i32, %c0_i32_0 : i32, i32
  }
  func.func @transform_8(%arg0: i32) -> (i32, i32) {
    %c0_i32 = arith.constant 0 : i32
    %c0_i32_0 = arith.constant 0 : i32
    %c0_i32_1 = arith.constant 0 : i32
    return %c0_i32, %c0_i32_0 : i32, i32
  }
  func.func @transform_9(%arg0: i32) -> (i32, i32) {
    %c0_i32 = arith.constant 0 : i32
    %c0_i32_0 = arith.constant 0 : i32
    %c0_i32_1 = arith.constant 0 : i32
    return %c0_i32, %c0_i32_0 : i32, i32
  }
  func.func @transform_10(%arg0: i32) -> (i32, i32) {
    %c0_i32 = arith.constant 0 : i32
    %c0_i32_0 = arith.constant 0 : i32
    %c0_i32_1 = arith.constant 0 : i32
    return %c0_i32, %c0_i32_0 : i32, i32
  }
  func.func @transform_11(%arg0: i32) -> (i32, i32) {
    %c0_i32 = arith.constant 0 : i32
    %c0_i32_0 = arith.constant 0 : i32
    %c0_i32_1 = arith.constant 0 : i32
    return %c0_i32, %c0_i32_0 : i32, i32
  }
  func.func @transform_12(%arg0: i32) -> (i32, i32) {
    %c0_i32 = arith.constant 0 : i32
    %c0_i32_0 = arith.constant 0 : i32
    %c0_i32_1 = arith.constant 0 : i32
    return %c0_i32, %c0_i32_0 : i32, i32
  }
  func.func @transform_13(%arg0: i32) -> (i32, i32) {
    %c0_i32 = arith.constant 0 : i32
    %c0_i32_0 = arith.constant 0 : i32
    %c0_i32_1 = arith.constant 0 : i32
    return %c0_i32, %c0_i32_0 : i32, i32
  }
  func.func @transform_14(%arg0: i32) -> (i32, i32) {
    %c0_i32 = arith.constant 0 : i32
    %c0_i32_0 = arith.constant 0 : i32
    %c0_i32_1 = arith.constant 0 : i32
    return %c0_i32, %c0_i32_0 : i32, i32
  }
  func.func @transform_15(%arg0: i32) -> (i32, i32) {
    %c0_i32 = arith.constant 0 : i32
    %c0_i32_0 = arith.constant 0 : i32
    %c0_i32_1 = arith.constant 0 : i32
    return %c0_i32, %c0_i32_0 : i32, i32
  }
  func.func @transform_16(%arg0: i32) -> (i32, i32) {
    %c0_i32 = arith.constant 0 : i32
    %c0_i32_0 = arith.constant 0 : i32
    %c0_i32_1 = arith.constant 0 : i32
    return %c0_i32, %c0_i32_0 : i32, i32
  }
  func.func @transform_17(%arg0: i32) -> (i32, i32) {
    %c0_i32 = arith.constant 0 : i32
    %c0_i32_0 = arith.constant 0 : i32
    %c0_i32_1 = arith.constant 0 : i32
    return %c0_i32, %c0_i32_0 : i32, i32
  }
  func.func @transform_18(%arg0: i32) -> (i32, i32) {
    %c0_i32 = arith.constant 0 : i32
    %c0_i32_0 = arith.constant 0 : i32
    %c0_i32_1 = arith.constant 0 : i32
    return %c0_i32, %c0_i32_0 : i32, i32
  }
  func.func @transform_19(%arg0: i32) -> (i32, i32) {
    %c0_i32 = arith.constant 0 : i32
    %c0_i32_0 = arith.constant 0 : i32
    %c0_i32_1 = arith.constant 0 : i32
    return %c0_i32, %c0_i32_0 : i32, i32
  }
  func.func @transform_20(%arg0: i32) -> (i32, i32) {
    %c0_i32 = arith.constant 0 : i32
    %c0_i32_0 = arith.constant 0 : i32
    %c0_i32_1 = arith.constant 0 : i32
    return %c0_i32, %c0_i32_0 : i32, i32
  }
  func.func @transform_21(%arg0: i32) -> (i32, i32) {
    %c0_i32 = arith.constant 0 : i32
    %c0_i32_0 = arith.constant 0 : i32
    %c0_i32_1 = arith.constant 0 : i32
    return %c0_i32, %c0_i32_0 : i32, i32
  }
  func.func @transform_22(%arg0: i32) -> (i32, i32) {
    %c0_i32 = arith.constant 0 : i32
    %c0_i32_0 = arith.constant 0 : i32
    %c0_i32_1 = arith.constant 0 : i32
    return %c0_i32, %c0_i32_0 : i32, i32
  }
  func.func @transform_23(%arg0: i32) -> (i32, i32) {
    %c0_i32 = arith.constant 0 : i32
    %c0_i32_0 = arith.constant 0 : i32
    return %arg0, %c0_i32 : i32, i32
  }
  func.func @transform_24(%arg0: i32) -> (i32, i32) {
    %c0_i32 = arith.constant 0 : i32
    %c0_i32_0 = arith.constant 0 : i32
    return %arg0, %c0_i32 : i32, i32
  }
  func.func @transform_25(%arg0: i32) -> (i32, i32, i32) {
    %c0_i32 = arith.constant 0 : i32
    %c0_i32_0 = arith.constant 0 : i32
    %c0_i32_1 = arith.constant 0 : i32
    return %arg0, %c0_i32, %c0_i32_0 : i32, i32, i32
  }
}

</mosaic_0001>

<llo_original>
// kernel: tpu_custom_call.1
$region0: #{tpu_custom_call.1}
  #allocation0 [shape = 'u32[]', space=smem, size = 0x4, offset = 0x4, fixed_abs, tag = 'smem constant byte address 0x4 - core index']
  #allocation1 [shape = 'u32[144,128]{1,0:T(1,128)}', space=vmem, size = 0x12000, scoped, tag = 'internal scratch']
  %s0 = inlined_call_operand.hbm [shape: f32[8,32], index: 0, kind: input, shape index: {}]
  %s1 = inlined_call_operand.hbm [shape: f32[8,32], index: 1, kind: input, shape index: {}]
  %s2 = inlined_call_operand.vmem [shape: s32[8,1], index: 2, kind: input, shape index: {}]
  %s3 = inlined_call_operand.hbm [shape: s32[1,8], index: 3, kind: input, shape index: {}]
  %s4 = inlined_call_operand.hbm [shape: f32[1,8], index: 4, kind: input, shape index: {}]
  %s5 = inlined_call_operand.hbm [shape: f32[8,32], index: 5, kind: input, shape index: {}]
  %s6 = inlined_call_operand.hbm [shape: f32[8,32], index: 6, kind: input, shape index: {}]
  %s7 = inlined_call_operand.hbm [shape: f32[8,32], index: 7, kind: input, shape index: {}]
  %s8 = inlined_call_operand.hbm [shape: f32[8,32], index: 8, kind: input, shape index: {}]
  %s9 = inlined_call_operand.hbm [shape: f32[4,32], index: 9, kind: input, shape index: {}]
  %s10 = inlined_call_operand.hbm [shape: f32[1,32], index: 10, kind: input, shape index: {}]
  %s11 = inlined_call_operand.hbm [shape: f32[1,32], index: 11, kind: input, shape index: {}]
  %s12 = inlined_call_operand.hbm [shape: f32[32,32], index: 12, kind: input, shape index: {}]
  %s13 = inlined_call_operand.vmem [shape: f32[32,32], index: 13, kind: input, shape index: {}]
  %s14 = inlined_call_operand.hbm [shape: f32[32,32], index: 14, kind: input, shape index: {}]
  %s15 = inlined_call_operand.hbm [shape: f32[32,32], index: 15, kind: input, shape index: {}]
  %s16 = inlined_call_operand.hbm [shape: f32[32,32], index: 16, kind: input, shape index: {}]
  %s17 = inlined_call_operand.hbm [shape: f32[32,32], index: 17, kind: input, shape index: {}]
  %s18 = inlined_call_operand.vmem [shape: f32[1,32], index: 18, kind: input, shape index: {}]
  %s19 = inlined_call_operand.vmem [shape: f32[1,32], index: 19, kind: input, shape index: {}]
  %s20 = inlined_call_operand.hbm [shape: f32[32,128], index: 20, kind: input, shape index: {}]
  %s21 = inlined_call_operand.hbm [shape: f32[32,64], index: 21, kind: input, shape index: {}]
  %s22 = inlined_call_operand.vmem [shape: f32[4,64], index: 22, kind: input, shape index: {}]
  %s23 = inlined_call_operand.hbm [shape: f32[8,32], index: 23, kind: output, shape index: {0}]
  %s24 = inlined_call_operand.hbm [shape: f32[8,128], index: 24, kind: output, shape index: {1}]
  %s25 = inlined_call_operand.hbm [shape: f32[8,4,64], index: 25, kind: output, shape index: {2}]
  %26 = xla_tuple %s23, %s24, %s25
  %s27 = sld [smem:[#allocation0]]
  $region190: #{tpu_custom_call.1} parent=0
    _
  %s29 = ssub.s32 1, %s27
  %s30 = scalar_select 0, %s29, %s27
  $region1: #{tpu_custom_call.1} parent=0
    #allocation2 [shape = 'u8[4096]{0}', space=vmem, size = 0x1000, scoped, tag = 'input window, operand 0, single buffered']
    #allocation3 [shape = 's32[1]{0}', space=sflag, size = 0x4, scoped, tag = 'scoped memory for tpu_custom_call.1']
    #allocation4 [shape = 's32[1]{0}', space=sflag, size = 0x4, scoped, tag = 'scoped memory for tpu_custom_call.1']
    #allocation5 [shape = 'u8[4096]{0}', space=vmem, size = 0x1000, scoped, tag = 'input window, operand 1, single buffered']
    #allocation6 [shape = 's32[1]{0}', space=sflag, size = 0x4, scoped, tag = 'scoped memory for tpu_custom_call.1']
    #allocation7 [shape = 'u8[512]{0}', space=vmem, size = 0x400, scoped, tag = 'input window, operand 3, single buffered']
    #allocation8 [shape = 'u8[512]{0}', space=vmem, size = 0x400, scoped, tag = 'input window, operand 4, single buffered']
    #allocation9 [shape = 's32[1]{0}', space=sflag, size = 0x4, scoped, tag = 'scoped memory for tpu_custom_call.1']
    #allocation10 [shape = 'u8[4096]{0}', space=vmem, size = 0x1000, scoped, tag = 'input window, operand 5, single buffered']
    #allocation11 [shape = 'u8[4096]{0}', space=vmem, size = 0x1000, scoped, tag = 'input window, operand 6, single buffered']
    #allocation12 [shape = 's32[1]{0}', space=sflag, size = 0x4, scoped, tag = 'scoped memory for tpu_custom_call.1']
    #allocation13 [shape = 'u8[4096]{0}', space=vmem, size = 0x1000, scoped, tag = 'input window, operand 7, single buffered']
    #allocation14 [shape = 'u8[4096]{0}', space=vmem, size = 0x1000, scoped, tag = 'input window, operand 8, single buffered']
    #allocation15 [shape = 's32[1]{0}', space=sflag, size = 0x4, scoped, tag = 'scoped memory for tpu_custom_call.1']
    #allocation16 [shape = 'u8[2048]{0}', space=vmem, size = 0x800, scoped, tag = 'input window, operand 9, single buffered']
    #allocation17 [shape = 'u8[512]{0}', space=vmem, size = 0x400, scoped, tag = 'input window, operand 10, single buffered']
    #allocation18 [shape = 's32[1]{0}', space=sflag, size = 0x4, scoped, tag = 'scoped memory for tpu_custom_call.1']
    #allocation19 [shape = 'u8[512]{0}', space=vmem, size = 0x400, scoped, tag = 'input window, operand 11, single buffered']
    #allocation20 [shape = 'u8[16384]{0}', space=vmem, size = 0x4000, scoped, tag = 'input window, operand 12, single buffered']
    #allocation21 [shape = 's32[1]{0}', space=sflag, size = 0x4, scoped, tag = 'scoped memory for tpu_custom_call.1']
    #allocation22 [shape = 'u8[16384]{0}', space=vmem, size = 0x4000, scoped, tag = 'input window, operand 14, single buffered']
    #allocation23 [shape = 'u8[16384]{0}', space=vmem, size = 0x4000, scoped, tag = 'input window, operand 15, single buffered']
    #allocation24 [shape = 's32[1]{0}', space=sflag, size = 0x4, scoped, tag = 'scoped memory for tpu_custom_call.1']
    #allocation25 [shape = 'u8[16384]{0}', space=vmem, size = 0x4000, scoped, tag = 'input window, operand 16, single buffered']
    #allocation26 [shape = 'u8[16384]{0}', space=vmem, size = 0x4000, scoped, tag = 'input window, operand 17, single buffered']
    #allocation27 [shape = 's32[1]{0}', space=sflag, size = 0x4, scoped, tag = 'scoped memory for tpu_custom_call.1']
    #allocation28 [shape = 'u8[16384]{0}', space=vmem, size = 0x4000, scoped, tag = 'input window, operand 20, single buffered']
    #allocation29 [shape = 'u8[16384]{0}', space=vmem, size = 0x4000, scoped, tag = 'input window, operand 21, single buffered']
    #allocation30 [shape = 's32[1]{0}', space=sflag, size = 0x4, scoped, tag = 'scoped memory for tpu_custom_call.1']
    #allocation31 [shape = 'u8[4096]{0}', space=vmem, size = 0x1000, scoped, tag = 'output window, operand 0, single buffered']
    #allocation32 [shape = 'u8[4096]{0}', space=vmem, size = 0x1000, scoped, tag = 'output window, operand 1, single buffered']
    #allocation33 [shape = 's32[1]{0}', space=sflag, size = 0x4, scoped, tag = 'scoped memory for tpu_custom_call.1']
    #allocation34 [shape = 'u8[16384]{0}', space=vmem, size = 0x4000, scoped, tag = 'output window, operand 2, single buffered']
    %31 = vsyncpa [#allocation3], 0
    %32 = vsyncpa [#allocation6], 0
    %33 = vsyncpa [#allocation9], 0
    %34 = vsyncpa [#allocation12], 0
    %35 = vsyncpa [#allocation15], 0
    %36 = vsyncpa [#allocation18], 0
    %37 = vsyncpa [#allocation21], 0
    %38 = vsyncpa [#allocation24], 0
    %39 = vsyncpa [#allocation27], 0
    %40 = vsyncpa [#allocation30], 0
    %41 = vsyncpa [#allocation4], 0
    %42 = vsyncpa [#allocation33], 0
    // Predicated region
    $region2: #{tpu_custom_call.1} parent=1 // pred_check
      _
    $region3: #{tpu_custom_call.1} parent=1 // pred_check_branch
      %44 = sbr.rel (0) target = $region5
    $region4: #{tpu_custom_call.1} parent=1 // pred_region
      %s46 = ssub.s32 128, 128
      %47 = vsyncadd [#allocation3], %s46
      %s49 = sshll.u32 [#allocation2], 4
      %s50 = int_to_ptr.vmem [resolvable:$true] %s49
      %52 = dma.hbm_to_vmem [thread:$0]  %s0, 128, %s50, [#allocation3]
    $region5: #{tpu_custom_call.1} parent=1 // pred_fallthru
      _
    // Predicated region
    $region6: #{tpu_custom_call.1} parent=1 // pred_check
      _
    $region7: #{tpu_custom_call.1} parent=1 // pred_check_branch
      %54 = sbr.rel (0) target = $region9
    $region8: #{tpu_custom_call.1} parent=1 // pred_region
      %s56 = ssub.s32 128, 128
      %57 = vsyncadd [#allocation6], %s56
      %s59 = sshll.u32 [#allocation5], 4
      %s60 = int_to_ptr.vmem [resolvable:$true] %s59
      %62 = dma.hbm_to_vmem [thread:$0]  %s1, 128, %s60, [#allocation6]
    $region9: #{tpu_custom_call.1} parent=1 // pred_fallthru
      _
    // Predicated region
    $region10: #{tpu_custom_call.1} parent=1 // pred_check
      _
    $region11: #{tpu_custom_call.1} parent=1 // pred_check_branch
      %64 = sbr.rel (0) target = $region13
    $region12: #{tpu_custom_call.1} parent=1 // pred_region
      _
    $region13: #{tpu_custom_call.1} parent=1 // pred_fallthru
      _
    // Predicated region
    $region14: #{tpu_custom_call.1} parent=1 // pred_check
      _
    $region15: #{tpu_custom_call.1} parent=1 // pred_check_branch
      %66 = sbr.rel (0) target = $region17
    $region16: #{tpu_custom_call.1} parent=1 // pred_region
      %s68 = ssub.s32 16, 16
      %69 = vsyncadd [#allocation6], %s68
      %s71 = sshll.u32 [#allocation7], 4
      %s72 = int_to_ptr.vmem [resolvable:$true] %s71
      %74 = dma.hbm_to_vmem [thread:$0]  %s3, 16, %s72, [#allocation6]
    $region17: #{tpu_custom_call.1} parent=1 // pred_fallthru
      _
    // Predicated region
    $region18: #{tpu_custom_call.1} parent=1 // pred_check
      _
    $region19: #{tpu_custom_call.1} parent=1 // pred_check_branch
      %76 = sbr.rel (0) target = $region21
    $region20: #{tpu_custom_call.1} parent=1 // pred_region
      %s78 = ssub.s32 16, 16
      %79 = vsyncadd [#allocation9], %s78
      %s81 = sshll.u32 [#allocation8], 4
      %s82 = int_to_ptr.vmem [resolvable:$true] %s81
      %84 = dma.hbm_to_vmem [thread:$0]  %s4, 16, %s82, [#allocation9]
    $region21: #{tpu_custom_call.1} parent=1 // pred_fallthru
      _
    // Predicated region
    $region22: #{tpu_custom_call.1} parent=1 // pred_check
      _
    $region23: #{tpu_custom_call.1} parent=1 // pred_check_branch
      %86 = sbr.rel (0) target = $region25
    $region24: #{tpu_custom_call.1} parent=1 // pred_region
      %s88 = ssub.s32 128, 128
      %89 = vsyncadd [#allocation9], %s88
      %s91 = sshll.u32 [#allocation10], 4
      %s92 = int_to_ptr.vmem [resolvable:$true] %s91
      %94 = dma.hbm_to_vmem [thread:$0]  %s5, 128, %s92, [#allocation9]
    $region25: #{tpu_custom_call.1} parent=1 // pred_fallthru
      _
    // Predicated region
    $region26: #{tpu_custom_call.1} parent=1 // pred_check
      _
    $region27: #{tpu_custom_call.1} parent=1 // pred_check_branch
      %96 = sbr.rel (0) target = $region29
    $region28: #{tpu_custom_call.1} parent=1 // pred_region
      %s98 = ssub.s32 128, 128
      %99 = vsyncadd [#allocation12], %s98
      %s101 = sshll.u32 [#allocation11], 4
      %s102 = int_to_ptr.vmem [resolvable:$true] %s101
      %104 = dma.hbm_to_vmem [thread:$0]  %s6, 128, %s102, [#allocation12]
    $region29: #{tpu_custom_call.1} parent=1 // pred_fallthru
      _
    // Predicated region
    $region30: #{tpu_custom_call.1} parent=1 // pred_check
      _
    $region31: #{tpu_custom_call.1} parent=1 // pred_check_branch
      %106 = sbr.rel (0) target = $region33
    $region32: #{tpu_custom_call.1} parent=1 // pred_region
      %s108 = ssub.s32 128, 128
      %109 = vsyncadd [#allocation12], %s108
      %s111 = sshll.u32 [#allocation13], 4
      %s112 = int_to_ptr.vmem [resolvable:$true] %s111
      %114 = dma.hbm_to_vmem [thread:$0]  %s7, 128, %s112, [#allocation12]
    $region33: #{tpu_custom_call.1} parent=1 // pred_fallthru
      _
    // Predicated region
    $region34: #{tpu_custom_call.1} parent=1 // pred_check
      _
    $region35: #{tpu_custom_call.1} parent=1 // pred_check_branch
      %116 = sbr.rel (0) target = $region37
    $region36: #{tpu_custom_call.1} parent=1 // pred_region
      %s118 = ssub.s32 128, 128
      %119 = vsyncadd [#allocation15], %s118
      %s121 = sshll.u32 [#allocation14], 4
      %s122 = int_to_ptr.vmem [resolvable:$true] %s121
      %124 = dma.hbm_to_vmem [thread:$0]  %s8, 128, %s122, [#allocation15]
    $region37: #{tpu_custom_call.1} parent=1 // pred_fallthru
      _
    // Predicated region
    $region38: #{tpu_custom_call.1} parent=1 // pred_check
      _
    $region39: #{tpu_custom_call.1} parent=1 // pred_check_branch
      %126 = sbr.rel (0) target = $region41
    $region40: #{tpu_custom_call.1} parent=1 // pred_region
      %s128 = ssub.s32 64, 64
      %129 = vsyncadd [#allocation15], %s128
      %s131 = sshll.u32 [#allocation16], 4
      %s132 = int_to_ptr.vmem [resolvable:$true] %s131
      %134 = dma.hbm_to_vmem [thread:$0]  %s9, 64, %s132, [#allocation15]
    $region41: #{tpu_custom_call.1} parent=1 // pred_fallthru
      _
    // Predicated region
    $region42: #{tpu_custom_call.1} parent=1 // pred_check
      _
    $region43: #{tpu_custom_call.1} parent=1 // pred_check_branch
      %136 = sbr.rel (0) target = $region45
    $region44: #{tpu_custom_call.1} parent=1 // pred_region
      %s138 = ssub.s32 16, 16
      %139 = vsyncadd [#allocation18], %s138
      %s141 = sshll.u32 [#allocation17], 4
      %s142 = int_to_ptr.vmem [resolvable:$true] %s141
      %144 = dma.hbm_to_vmem [thread:$0]  %s10, 16, %s142, [#allocation18]
    $region45: #{tpu_custom_call.1} parent=1 // pred_fallthru
      _
    // Predicated region
    $region46: #{tpu_custom_call.1} parent=1 // pred_check
      _
    $region47: #{tpu_custom_call.1} parent=1 // pred_check_branch
      %146 = sbr.rel (0) target = $region49
    $region48: #{tpu_custom_call.1} parent=1 // pred_region
      %s148 = ssub.s32 16, 16
      %149 = vsyncadd [#allocation18], %s148
      %s151 = sshll.u32 [#allocation19], 4
      %s152 = int_to_ptr.vmem [resolvable:$true] %s151
      %154 = dma.hbm_to_vmem [thread:$0]  %s11, 16, %s152, [#allocation18]
    $region49: #{tpu_custom_call.1} parent=1 // pred_fallthru
      _
    // Predicated region
    $region50: #{tpu_custom_call.1} parent=1 // pred_check
      _
    $region51: #{tpu_custom_call.1} parent=1 // pred_check_branch
      %156 = sbr.rel (0) target = $region53
    $region52: #{tpu_custom_call.1} parent=1 // pred_region
      %s158 = ssub.s32 512, 512
      %159 = vsyncadd [#allocation21], %s158
      %s160 = sshll.u32 [#allocation20], 4
      %s161 = int_to_ptr.vmem [resolvable:$true] %s160
      %166 = dma.hbm_to_vmem [thread:$0]  %s12, 512, %s161, [#allocation21], 128, 128, 8
    $region53: #{tpu_custom_call.1} parent=1 // pred_fallthru
      _
    // Predicated region
    $region54: #{tpu_custom_call.1} parent=1 // pred_check
      _
    $region55: #{tpu_custom_call.1} parent=1 // pred_check_branch
      %168 = sbr.rel (0) target = $region57
    $region56: #{tpu_custom_call.1} parent=1 // pred_region
      _
    $region57: #{tpu_custom_call.1} parent=1 // pred_fallthru
      _
    // Predicated region
    $region58: #{tpu_custom_call.1} parent=1 // pred_check
      _
    $region59: #{tpu_custom_call.1} parent=1 // pred_check_branch
      %170 = sbr.rel (0) target = $region61
    $region60: #{tpu_custom_call.1} parent=1 // pred_region
      %s172 = ssub.s32 512, 512
      %173 = vsyncadd [#allocation21], %s172
      %s174 = sshll.u32 [#allocation22], 4
      %s175 = int_to_ptr.vmem [resolvable:$true] %s174
      %180 = dma.hbm_to_vmem [thread:$0]  %s14, 512, %s175, [#allocation21], 128, 128, 8
    $region61: #{tpu_custom_call.1} parent=1 // pred_fallthru
      _
    // Predicated region
    $region62: #{tpu_custom_call.1} parent=1 // pred_check
      _
    $region63: #{tpu_custom_call.1} parent=1 // pred_check_branch
      %182 = sbr.rel (0) target = $region65
    $region64: #{tpu_custom_call.1} parent=1 // pred_region
      %s184 = ssub.s32 512, 512
      %185 = vsyncadd [#allocation24], %s184
      %s186 = sshll.u32 [#allocation23], 4
      %s187 = int_to_ptr.vmem [resolvable:$true] %s186
      %192 = dma.hbm_to_vmem [thread:$0]  %s15, 512, %s187, [#allocation24], 128, 128, 8
    $region65: #{tpu_custom_call.1} parent=1 // pred_fallthru
      _
    // Predicated region
    $region66: #{tpu_custom_call.1} parent=1 // pred_check
      _
    $region67: #{tpu_custom_call.1} parent=1 // pred_check_branch
      %194 = sbr.rel (0) target = $region69
    $region68: #{tpu_custom_call.1} parent=1 // pred_region
      %s196 = ssub.s32 512, 512
      %197 = vsyncadd [#allocation24], %s196
      %s198 = sshll.u32 [#allocation25], 4
      %s199 = int_to_ptr.vmem [resolvable:$true] %s198
      %204 = dma.hbm_to_vmem [thread:$0]  %s16, 512, %s199, [#allocation24], 128, 128, 8
    $region69: #{tpu_custom_call.1} parent=1 // pred_fallthru
      _
    // Predicated region
    $region70: #{tpu_custom_call.1} parent=1 // pred_check
      _
    $region71: #{tpu_custom_call.1} parent=1 // pred_check_branch
      %206 = sbr.rel (0) target = $region73
    $region72: #{tpu_custom_call.1} parent=1 // pred_region
      %s208 = ssub.s32 512, 512
      %209 = vsyncadd [#allocation27], %s208
      %s210 = sshll.u32 [#allocation26], 4
      %s211 = int_to_ptr.vmem [resolvable:$true] %s210
      %216 = dma.hbm_to_vmem [thread:$0]  %s17, 512, %s211, [#allocation27], 128, 128, 8
    $region73: #{tpu_custom_call.1} parent=1 // pred_fallthru
      _
    // Predicated region
    $region74: #{tpu_custom_call.1} parent=1 // pred_check
      _
    $region75: #{tpu_custom_call.1} parent=1 // pred_check_branch
      %218 = sbr.rel (0) target = $region77
    $region76: #{tpu_custom_call.1} parent=1 // pred_region
      _
    $region77: #{tpu_custom_call.1} parent=1 // pred_fallthru
      _
    // Predicated region
    $region78: #{tpu_custom_call.1} parent=1 // pred_check
      _
    $region79: #{tpu_custom_call.1} parent=1 // pred_check_branch
      %220 = sbr.rel (0) target = $region81
    $region80: #{tpu_custom_call.1} parent=1 // pred_region
      _
    $region81: #{tpu_custom_call.1} parent=1 // pred_fallthru
      _
    // Predicated region
    $region82: #{tpu_custom_call.1} parent=1 // pred_check
      _
    $region83: #{tpu_custom_call.1} parent=1 // pred_check_branch
      %222 = sbr.rel (0) target = $region85
    $region84: #{tpu_custom_call.1} parent=1 // pred_region
      %s224 = ssub.s32 512, 512
      %225 = vsyncadd [#allocation27], %s224
      %s226 = sshll.u32 [#allocation28], 4
      %s227 = int_to_ptr.vmem [resolvable:$true] %s226
      %232 = dma.hbm_to_vmem [thread:$0]  %s20, 512, %s227, [#allocation27], 128, 128, 8
    $region85: #{tpu_custom_call.1} parent=1 // pred_fallthru
      _
    // Predicated region
    $region86: #{tpu_custom_call.1} parent=1 // pred_check
      _
    $region87: #{tpu_custom_call.1} parent=1 // pred_check_branch
      %234 = sbr.rel (0) target = $region89
    $region88: #{tpu_custom_call.1} parent=1 // pred_region
      %s236 = ssub.s32 512, 512
      %237 = vsyncadd [#allocation30], %s236
      %s238 = sshll.u32 [#allocation29], 4
      %s239 = int_to_ptr.vmem [resolvable:$true] %s238
      %244 = dma.hbm_to_vmem [thread:$0]  %s21, 512, %s239, [#allocation30], 128, 128, 8
    $region89: #{tpu_custom_call.1} parent=1 // pred_fallthru
      _
    // Predicated region
    $region90: #{tpu_custom_call.1} parent=1 // pred_check
      _
    $region91: #{tpu_custom_call.1} parent=1 // pred_check_branch
      %246 = sbr.rel (0) target = $region93
    $region92: #{tpu_custom_call.1} parent=1 // pred_region
      _
    $region93: #{tpu_custom_call.1} parent=1 // pred_fallthru
      _
    // Predicated region
    $region94: #{tpu_custom_call.1} parent=1 // pred_check
      _
    $region95: #{tpu_custom_call.1} parent=1 // pred_check_branch
      %248 = sbr.rel (0) target = $region97
    $region96: #{tpu_custom_call.1} parent=1 // pred_region
      %249 = dma.done [#allocation3], 128
    $region97: #{tpu_custom_call.1} parent=1 // pred_fallthru
      _
    // Predicated region
    $region98: #{tpu_custom_call.1} parent=1 // pred_check
      _
    $region99: #{tpu_custom_call.1} parent=1 // pred_check_branch
      %251 = sbr.rel (0) target = $region101
    $region100: #{tpu_custom_call.1} parent=1 // pred_region
      %252 = dma.done [#allocation6], 128
    $region101: #{tpu_custom_call.1} parent=1 // pred_fallthru
      _
    // Predicated region
    $region102: #{tpu_custom_call.1} parent=1 // pred_check
      _
    $region103: #{tpu_custom_call.1} parent=1 // pred_check_branch
      %254 = sbr.rel (0) target = $region105
    $region104: #{tpu_custom_call.1} parent=1 // pred_region
      %255 = dma.done [#allocation6], 16
    $region105: #{tpu_custom_call.1} parent=1 // pred_fallthru
      _
    // Predicated region
    $region106: #{tpu_custom_call.1} parent=1 // pred_check
      _
    $region107: #{tpu_custom_call.1} parent=1 // pred_check_branch
      %257 = sbr.rel (0) target = $region109
    $region108: #{tpu_custom_call.1} parent=1 // pred_region
      %258 = dma.done [#allocation9], 16
    $region109: #{tpu_custom_call.1} parent=1 // pred_fallthru
      _
    // Predicated region
    $region110: #{tpu_custom_call.1} parent=1 // pred_check
      _
    $region111: #{tpu_custom_call.1} parent=1 // pred_check_branch
      %260 = sbr.rel (0) target = $region113
    $region112: #{tpu_custom_call.1} parent=1 // pred_region
      %261 = dma.done [#allocation9], 128
    $region113: #{tpu_custom_call.1} parent=1 // pred_fallthru
      _
    // Predicated region
    $region114: #{tpu_custom_call.1} parent=1 // pred_check
      _
    $region115: #{tpu_custom_call.1} parent=1 // pred_check_branch
      %263 = sbr.rel (0) target = $region117
    $region116: #{tpu_custom_call.1} parent=1 // pred_region
      %264 = dma.done [#allocation12], 128
    $region117: #{tpu_custom_call.1} parent=1 // pred_fallthru
      _
    // Predicated region
    $region118: #{tpu_custom_call.1} parent=1 // pred_check
      _
    $region119: #{tpu_custom_call.1} parent=1 // pred_check_branch
      %266 = sbr.rel (0) target = $region121
    $region120: #{tpu_custom_call.1} parent=1 // pred_region
      %267 = dma.done [#allocation12], 128
    $region121: #{tpu_custom_call.1} parent=1 // pred_fallthru
      _
    // Predicated region
    $region122: #{tpu_custom_call.1} parent=1 // pred_check
      _
    $region123: #{tpu_custom_call.1} parent=1 // pred_check_branch
      %269 = sbr.rel (0) target = $region125
    $region124: #{tpu_custom_call.1} parent=1 // pred_region
      %270 = dma.done [#allocation15], 128
    $region125: #{tpu_custom_call.1} parent=1 // pred_fallthru
      _
    // Predicated region
    $region126: #{tpu_custom_call.1} parent=1 // pred_check
      _
    $region127: #{tpu_custom_call.1} parent=1 // pred_check_branch
      %272 = sbr.rel (0) target = $region129
    $region128: #{tpu_custom_call.1} parent=1 // pred_region
      %273 = dma.done [#allocation15], 64
    $region129: #{tpu_custom_call.1} parent=1 // pred_fallthru
      _
    // Predicated region
    $region130: #{tpu_custom_call.1} parent=1 // pred_check
      _
    $region131: #{tpu_custom_call.1} parent=1 // pred_check_branch
      %275 = sbr.rel (0) target = $region133
    $region132: #{tpu_custom_call.1} parent=1 // pred_region
      %276 = dma.done [#allocation18], 16
    $region133: #{tpu_custom_call.1} parent=1 // pred_fallthru
      _
    // Predicated region
    $region134: #{tpu_custom_call.1} parent=1 // pred_check
      _
    $region135: #{tpu_custom_call.1} parent=1 // pred_check_branch
      %278 = sbr.rel (0) target = $region137
    $region136: #{tpu_custom_call.1} parent=1 // pred_region
      %279 = dma.done [#allocation18], 16
    $region137: #{tpu_custom_call.1} parent=1 // pred_fallthru
      _
    // Predicated region
    $region138: #{tpu_custom_call.1} parent=1 // pred_check
      _
    $region139: #{tpu_custom_call.1} parent=1 // pred_check_branch
      %281 = sbr.rel (0) target = $region141
    $region140: #{tpu_custom_call.1} parent=1 // pred_region
      %282 = dma.done [#allocation21], 512
    $region141: #{tpu_custom_call.1} parent=1 // pred_fallthru
      _
    // Predicated region
    $region142: #{tpu_custom_call.1} parent=1 // pred_check
      _
    $region143: #{tpu_custom_call.1} parent=1 // pred_check_branch
      %284 = sbr.rel (0) target = $region145
    $region144: #{tpu_custom_call.1} parent=1 // pred_region
      %285 = dma.done [#allocation21], 512
    $region145: #{tpu_custom_call.1} parent=1 // pred_fallthru
      _
    // Predicated region
    $region146: #{tpu_custom_call.1} parent=1 // pred_check
      _
    $region147: #{tpu_custom_call.1} parent=1 // pred_check_branch
      %287 = sbr.rel (0) target = $region149
    $region148: #{tpu_custom_call.1} parent=1 // pred_region
      %288 = dma.done [#allocation24], 512
    $region149: #{tpu_custom_call.1} parent=1 // pred_fallthru
      _
    // Predicated region
    $region150: #{tpu_custom_call.1} parent=1 // pred_check
      _
    $region151: #{tpu_custom_call.1} parent=1 // pred_check_branch
      %290 = sbr.rel (0) target = $region153
    $region152: #{tpu_custom_call.1} parent=1 // pred_region
      %291 = dma.done [#allocation24], 512
    $region153: #{tpu_custom_call.1} parent=1 // pred_fallthru
      _
    // Predicated region
    $region154: #{tpu_custom_call.1} parent=1 // pred_check
      _
    $region155: #{tpu_custom_call.1} parent=1 // pred_check_branch
      %293 = sbr.rel (0) target = $region157
    $region156: #{tpu_custom_call.1} parent=1 // pred_region
      %294 = dma.done [#allocation27], 512
    $region157: #{tpu_custom_call.1} parent=1 // pred_fallthru
      _
    // Predicated region
    $region158: #{tpu_custom_call.1} parent=1 // pred_check
      _
    $region159: #{tpu_custom_call.1} parent=1 // pred_check_branch
      %296 = sbr.rel (0) target = $region161
    $region160: #{tpu_custom_call.1} parent=1 // pred_region
      %297 = dma.done [#allocation27], 512
    $region161: #{tpu_custom_call.1} parent=1 // pred_fallthru
      _
    // Predicated region
    $region162: #{tpu_custom_call.1} parent=1 // pred_check
      _
    $region163: #{tpu_custom_call.1} parent=1 // pred_check_branch
      %299 = sbr.rel (0) target = $region165
    $region164: #{tpu_custom_call.1} parent=1 // pred_region
      %300 = dma.done [#allocation30], 512
    $region165: #{tpu_custom_call.1} parent=1 // pred_fallthru
      _
    %v301 = vld [vmem:[#allocation2] sm:$0xff]
    %v302 = vld [vmem:[#allocation5] sm:$0xff]
    %v303 = vld [vmem:[#allocation17] sm:$0x1]
    %v304 = vld [vmem:[#allocation19] sm:$0x1]
    %vm305 = vcmask 261120
    %v306 = vsel %vm305, %v301, 0.0
    %307 = vadd.xlane.f32.xlu0 %v306
    %v308 = vpop.xlane.xlu0 %307
    %v309 = vrcp.pop 32.0
    %v310 = vmul.f32 %v308, %v309
    %v311 = vsub.f32 %v301, %v310
    %v312 = vmul.f32 %v311, %v311
    %v313 = vsel %vm305, %v312, 0.0
    %314 = vadd.xlane.f32.xlu0 %v313
    %v315 = vpop.xlane.xlu0 %314
    %v316 = vmul.f32 %v315, %v309
    %v317 = vadd.f32 %v316, 1e-05
    %v318 = vrsqrt.pop %v317
    %v319 = vmul.f32 %v311, %v318
    %v321 = vlaneseq
    %v322 = vshrl.u32 %v321, 7
    %v323 = vsub.s32 0, %v322
    %v324 = vrot.slane %v303, %v323
    %v326 = vmul.f32 %v319, %v324
    %v328 = vlaneseq
    %v329 = vshrl.u32 %v328, 7
    %v330 = vsub.s32 0, %v329
    %v331 = vrot.slane %v304, %v330
    %v333 = vadd.f32 %v326, %v331
    %v334 = vsel %vm305, %v302, 0.0
    %335 = vadd.xlane.f32.xlu0 %v334
    %v336 = vpop.xlane.xlu0 %335
    %v337 = vmul.f32 %v336, %v309
    %v338 = vsub.f32 %v302, %v337
    %v339 = vmul.f32 %v338, %v338
    %v340 = vsel %vm305, %v339, 0.0
    %341 = vadd.xlane.f32.xlu0 %v340
    %v342 = vpop.xlane.xlu0 %341
    %v343 = vmul.f32 %v342, %v309
    %v344 = vadd.f32 %v343, 1e-05
    %v345 = vrsqrt.pop %v344
    %v346 = vmul.f32 %v338, %v345
    %v347 = vmul.f32 %v346, %v324
    %v348 = vadd.f32 %v347, %v331
    %v349 = vld [vmem:[#allocation20] sm:$0xff]
    %v350 = vld [vmem:[#allocation20 + $0x8] sm:$0xff]
    %v351 = vld [vmem:[#allocation20 + $0x10] sm:$0xff]
    %v352 = vld [vmem:[#allocation20 + $0x18] sm:$0xff]
    %v354 = vsel %vm305, %v333, 0
    %356 = vmatprep.subr.mxu0 0.0
    %357 = vmatpush1.msra.mxu0 0.0
    %358 = vmatprep.subr.mxu0 0.0
    %359 = vmatpush1.msra.mxu0 0.0
    %360 = vmatprep.subr.mxu0 0.0
    %361 = vmatpush1.msra.mxu0 0.0
    %362 = vmatprep.subr.mxu0 0.0
    %363 = vmatpush1.msra.mxu0 0.0
    %364 = vmatprep.subr.mxu0 0.0
    %365 = vmatpush1.msra.mxu0 0.0
    %366 = vmatprep.subr.mxu0 0.0
    %367 = vmatpush1.msra.mxu0 0.0
    %368 = vmatprep.subr.mxu0 0.0
    %369 = vmatpush1.msra.mxu0 0.0
    %370 = vmatprep.subr.mxu0 0.0
    %371 = vmatpush1.msra.mxu0 0.0
    %372 = vmatprep.subr.mxu0 0.0
    %373 = vmatpush1.msra.mxu0 0.0
    %374 = vmatprep.subr.mxu0 0.0
    %375 = vmatpush1.msra.mxu0 0.0
    %376 = vmatprep.subr.mxu0 0.0
    %377 = vmatpush1.msra.mxu0 0.0
    %378 = vmatprep.subr.mxu0 0.0
    %379 = vmatpush1.msra.mxu0 0.0
    %380 = vmatprep.subr.mxu0 0.0
    %381 = vmatpush1.msra.mxu0 %v352
    %382 = vmatprep.subr.mxu0 0.0
    %383 = vmatpush1.msra.mxu0 %v351
    %384 = vmatprep.subr.mxu0 0.0
    %385 = vmatpush1.msra.mxu0 %v350
    %386 = vmatprep.subr.mxu0 0.0
    %387 = vmatpush1.msra.mxu0 %v349
    %388 = vmatprep.subr.mxu0 0.0
    %389 = vmatpush2.msra.mxu0 0.0
    %390 = vmatprep.subr.mxu0 0.0
    %391 = vmatpush2.msra.mxu0 0.0
    %392 = vmatprep.subr.mxu0 0.0
    %393 = vmatpush2.msra.mxu0 0.0
    %394 = vmatprep.subr.mxu0 0.0
    %395 = vmatpush2.msra.mxu0 0.0
    %396 = vmatprep.subr.mxu0 0.0
    %397 = vmatpush2.msra.mxu0 0.0
    %398 = vmatprep.subr.mxu0 0.0
    %399 = vmatpush2.msra.mxu0 0.0
    %400 = vmatprep.subr.mxu0 0.0
    %401 = vmatpush2.msra.mxu0 0.0
    %402 = vmatprep.subr.mxu0 0.0
    %403 = vmatpush2.msra.mxu0 0.0
    %404 = vmatprep.subr.mxu0 0.0
    %405 = vmatpush2.msra.mxu0 0.0
    %406 = vmatprep.subr.mxu0 0.0
    %407 = vmatpush2.msra.mxu0 0.0
    %408 = vmatprep.subr.mxu0 0.0
    %409 = vmatpush2.msra.mxu0 0.0
    %410 = vmatprep.subr.mxu0 0.0
    %411 = vmatpush2.msra.mxu0 0.0
    %412 = vmatprep.subr.mxu0 0.0
    %413 = vmatpush2.msra.mxu0 0.0
    %414 = vmatprep.subr.mxu0 0.0
    %415 = vmatpush2.msra.mxu0 0.0
    %416 = vmatprep.subr.mxu0 0.0
    %417 = vmatpush2.msra.mxu0 0.0
    %418 = vmatprep.subr.mxu0 0.0
    %419 = vmatpush2.msra.mxu0 0.0
    %420 = vmatprep.mubr.f32.mxu0 0.0
    %421 = vmatmul.mubr.f32.gmra.mxu0 %v354
    %v422 = vpop.f32.mrf.mxu0
    %v423 = vadd.f32 0.0, %v422
    %v424 = vpop.f32.mrf.mxu0
    %425 = vdwg.mxu0
    %v426 = vld [vmem:[%s13] sm:$0xff]
    %v427 = vld [vmem:[%s13 + $0x8] sm:$0xff]
    %v428 = vld [vmem:[%s13 + $0x10] sm:$0xff]
    %v429 = vld [vmem:[%s13 + $0x18] sm:$0xff]
    %430 = vmatprep.subr.mxu0 0.0
    %431 = vmatpush1.msra.mxu0 0.0
    %432 = vmatprep.subr.mxu0 0.0
    %433 = vmatpush1.msra.mxu0 0.0
    %434 = vmatprep.subr.mxu0 0.0
    %435 = vmatpush1.msra.mxu0 0.0
    %436 = vmatprep.subr.mxu0 0.0
    %437 = vmatpush1.msra.mxu0 0.0
    %438 = vmatprep.subr.mxu0 0.0
    %439 = vmatpush1.msra.mxu0 0.0
    %440 = vmatprep.subr.mxu0 0.0
    %441 = vmatpush1.msra.mxu0 0.0
    %442 = vmatprep.subr.mxu0 0.0
    %443 = vmatpush1.msra.mxu0 0.0
    %444 = vmatprep.subr.mxu0 0.0
    %445 = vmatpush1.msra.mxu0 0.0
    %446 = vmatprep.subr.mxu0 0.0
    %447 = vmatpush1.msra.mxu0 0.0
    %448 = vmatprep.subr.mxu0 0.0
    %449 = vmatpush1.msra.mxu0 0.0
    %450 = vmatprep.subr.mxu0 0.0
    %451 = vmatpush1.msra.mxu0 0.0
    %452 = vmatprep.subr.mxu0 0.0
    %453 = vmatpush1.msra.mxu0 0.0
    %454 = vmatprep.subr.mxu0 0.0
    %455 = vmatpush1.msra.mxu0 %v429
    %456 = vmatprep.subr.mxu0 0.0
    %457 = vmatpush1.msra.mxu0 %v428
    %458 = vmatprep.subr.mxu0 0.0
    %459 = vmatpush1.msra.mxu0 %v427
    %460 = vmatprep.subr.mxu0 0.0
    %461 = vmatpush1.msra.mxu0 %v426
    %462 = vmatprep.subr.mxu0 0.0
    %463 = vmatpush2.msra.mxu0 0.0
    %464 = vmatprep.subr.mxu0 0.0
    %465 = vmatpush2.msra.mxu0 0.0
    %466 = vmatprep.subr.mxu0 0.0
    %467 = vmatpush2.msra.mxu0 0.0
    %468 = vmatprep.subr.mxu0 0.0
    %469 = vmatpush2.msra.mxu0 0.0
    %470 = vmatprep.subr.mxu0 0.0
    %471 = vmatpush2.msra.mxu0 0.0
    %472 = vmatprep.subr.mxu0 0.0
    %473 = vmatpush2.msra.mxu0 0.0
    %474 = vmatprep.subr.mxu0 0.0
    %475 = vmatpush2.msra.mxu0 0.0
    %476 = vmatprep.subr.mxu0 0.0
    %477 = vmatpush2.msra.mxu0 0.0
    %478 = vmatprep.subr.mxu0 0.0
    %479 = vmatpush2.msra.mxu0 0.0
    %480 = vmatprep.subr.mxu0 0.0
    %481 = vmatpush2.msra.mxu0 0.0
    %482 = vmatprep.subr.mxu0 0.0
    %483 = vmatpush2.msra.mxu0 0.0
    %484 = vmatprep.subr.mxu0 0.0
    %485 = vmatpush2.msra.mxu0 0.0
    %486 = vmatprep.subr.mxu0 0.0
    %487 = vmatpush2.msra.mxu0 0.0
    %488 = vmatprep.subr.mxu0 0.0
    %489 = vmatpush2.msra.mxu0 0.0
    %490 = vmatprep.subr.mxu0 0.0
    %491 = vmatpush2.msra.mxu0 0.0
    %492 = vmatprep.subr.mxu0 0.0
    %493 = vmatpush2.msra.mxu0 0.0
    %494 = vmatprep.mubr.f32.mxu0 0.0
    %495 = vmatmul.mubr.f32.gmra.mxu0 %v354
    %v496 = vpop.f32.mrf.mxu0
    %v497 = vadd.f32 0.0, %v496
    %v498 = vpop.f32.mrf.mxu0
    %499 = vdwg.mxu0
    %v500 = vld [vmem:[#allocation22] sm:$0xff]
    %v501 = vld [vmem:[#allocation22 + $0x8] sm:$0xff]
    %v502 = vld [vmem:[#allocation22 + $0x10] sm:$0xff]
    %v503 = vld [vmem:[#allocation22 + $0x18] sm:$0xff]
    %v505 = vsel %vm305, %v348, 0
    %507 = vmatprep.subr.mxu0 0.0
    %508 = vmatpush1.msra.mxu0 0.0
    %509 = vmatprep.subr.mxu0 0.0
    %510 = vmatpush1.msra.mxu0 0.0
    %511 = vmatprep.subr.mxu0 0.0
    %512 = vmatpush1.msra.mxu0 0.0
    %513 = vmatprep.subr.mxu0 0.0
    %514 = vmatpush1.msra.mxu0 0.0
    %515 = vmatprep.subr.mxu0 0.0
    %516 = vmatpush1.msra.mxu0 0.0
    %517 = vmatprep.subr.mxu0 0.0
    %518 = vmatpush1.msra.mxu0 0.0
    %519 = vmatprep.subr.mxu0 0.0
    %520 = vmatpush1.msra.mxu0 0.0
    %521 = vmatprep.subr.mxu0 0.0
    %522 = vmatpush1.msra.mxu0 0.0
    %523 = vmatprep.subr.mxu0 0.0
    %524 = vmatpush1.msra.mxu0 0.0
    %525 = vmatprep.subr.mxu0 0.0
    %526 = vmatpush1.msra.mxu0 0.0
    %527 = vmatprep.subr.mxu0 0.0
    %528 = vmatpush1.msra.mxu0 0.0
    %529 = vmatprep.subr.mxu0 0.0
    %530 = vmatpush1.msra.mxu0 0.0
    %531 = vmatprep.subr.mxu0 0.0
    %532 = vmatpush1.msra.mxu0 %v503
    %533 = vmatprep.subr.mxu0 0.0
    %534 = vmatpush1.msra.mxu0 %v502
    %535 = vmatprep.subr.mxu0 0.0
    %536 = vmatpush1.msra.mxu0 %v501
    %537 = vmatprep.subr.mxu0 0.0
    %538 = vmatpush1.msra.mxu0 %v500
    %539 = vmatprep.subr.mxu0 0.0
    %540 = vmatpush2.msra.mxu0 0.0
    %541 = vmatprep.subr.mxu0 0.0
    %542 = vmatpush2.msra.mxu0 0.0
    %543 = vmatprep.subr.mxu0 0.0
    %544 = vmatpush2.msra.mxu0 0.0
    %545 = vmatprep.subr.mxu0 0.0
    %546 = vmatpush2.msra.mxu0 0.0
    %547 = vmatprep.subr.mxu0 0.0
    %548 = vmatpush2.msra.mxu0 0.0
    %549 = vmatprep.subr.mxu0 0.0
    %550 = vmatpush2.msra.mxu0 0.0
    %551 = vmatprep.subr.mxu0 0.0
    %552 = vmatpush2.msra.mxu0 0.0
    %553 = vmatprep.subr.mxu0 0.0
    %554 = vmatpush2.msra.mxu0 0.0
    %555 = vmatprep.subr.mxu0 0.0
    %556 = vmatpush2.msra.mxu0 0.0
    %557 = vmatprep.subr.mxu0 0.0
    %558 = vmatpush2.msra.mxu0 0.0
    %559 = vmatprep.subr.mxu0 0.0
    %560 = vmatpush2.msra.mxu0 0.0
    %561 = vmatprep.subr.mxu0 0.0
    %562 = vmatpush2.msra.mxu0 0.0
    %563 = vmatprep.subr.mxu0 0.0
    %564 = vmatpush2.msra.mxu0 0.0
    %565 = vmatprep.subr.mxu0 0.0
    %566 = vmatpush2.msra.mxu0 0.0
    %567 = vmatprep.subr.mxu0 0.0
    %568 = vmatpush2.msra.mxu0 0.0
    %569 = vmatprep.subr.mxu0 0.0
    %570 = vmatpush2.msra.mxu0 0.0
    %571 = vmatprep.mubr.f32.mxu0 0.0
    %572 = vmatmul.mubr.f32.gmra.mxu0 %v505
    %v573 = vpop.f32.mrf.mxu0
    %v574 = vadd.f32 0.0, %v573
    %v575 = vpop.f32.mrf.mxu0
    %576 = vdwg.mxu0
    %v577 = vld [vmem:[#allocation23] sm:$0xff]
    %v578 = vld [vmem:[#allocation23 + $0x8] sm:$0xff]
    %v579 = vld [vmem:[#allocation23 + $0x10] sm:$0xff]
    %v580 = vld [vmem:[#allocation23 + $0x18] sm:$0xff]
    %581 = vmatprep.subr.mxu0 0.0
    %582 = vmatpush1.msra.mxu0 0.0
    %583 = vmatprep.subr.mxu0 0.0
    %584 = vmatpush1.msra.mxu0 0.0
    %585 = vmatprep.subr.mxu0 0.0
    %586 = vmatpush1.msra.mxu0 0.0
    %587 = vmatprep.subr.mxu0 0.0
    %588 = vmatpush1.msra.mxu0 0.0
    %589 = vmatprep.subr.mxu0 0.0
    %590 = vmatpush1.msra.mxu0 0.0
    %591 = vmatprep.subr.mxu0 0.0
    %592 = vmatpush1.msra.mxu0 0.0
    %593 = vmatprep.subr.mxu0 0.0
    %594 = vmatpush1.msra.mxu0 0.0
    %595 = vmatprep.subr.mxu0 0.0
    %596 = vmatpush1.msra.mxu0 0.0
    %597 = vmatprep.subr.mxu0 0.0
    %598 = vmatpush1.msra.mxu0 0.0
    %599 = vmatprep.subr.mxu0 0.0
    %600 = vmatpush1.msra.mxu0 0.0
    %601 = vmatprep.subr.mxu0 0.0
    %602 = vmatpush1.msra.mxu0 0.0
    %603 = vmatprep.subr.mxu0 0.0
    %604 = vmatpush1.msra.mxu0 0.0
    %605 = vmatprep.subr.mxu0 0.0
    %606 = vmatpush1.msra.mxu0 %v580
    %607 = vmatprep.subr.mxu0 0.0
    %608 = vmatpush1.msra.mxu0 %v579
    %609 = vmatprep.subr.mxu0 0.0
    %610 = vmatpush1.msra.mxu0 %v578
    %611 = vmatprep.subr.mxu0 0.0
    %612 = vmatpush1.msra.mxu0 %v577
    %613 = vmatprep.subr.mxu0 0.0
    %614 = vmatpush2.msra.mxu0 0.0
    %615 = vmatprep.subr.mxu0 0.0
    %616 = vmatpush2.msra.mxu0 0.0
    %617 = vmatprep.subr.mxu0 0.0
    %618 = vmatpush2.msra.mxu0 0.0
    %619 = vmatprep.subr.mxu0 0.0
    %620 = vmatpush2.msra.mxu0 0.0
    %621 = vmatprep.subr.mxu0 0.0
    %622 = vmatpush2.msra.mxu0 0.0
    %623 = vmatprep.subr.mxu0 0.0
    %624 = vmatpush2.msra.mxu0 0.0
    %625 = vmatprep.subr.mxu0 0.0
    %626 = vmatpush2.msra.mxu0 0.0
    %627 = vmatprep.subr.mxu0 0.0
    %628 = vmatpush2.msra.mxu0 0.0
    %629 = vmatprep.subr.mxu0 0.0
    %630 = vmatpush2.msra.mxu0 0.0
    %631 = vmatprep.subr.mxu0 0.0
    %632 = vmatpush2.msra.mxu0 0.0
    %633 = vmatprep.subr.mxu0 0.0
    %634 = vmatpush2.msra.mxu0 0.0
    %635 = vmatprep.subr.mxu0 0.0
    %636 = vmatpush2.msra.mxu0 0.0
    %637 = vmatprep.subr.mxu0 0.0
    %638 = vmatpush2.msra.mxu0 0.0
    %639 = vmatprep.subr.mxu0 0.0
    %640 = vmatpush2.msra.mxu0 0.0
    %641 = vmatprep.subr.mxu0 0.0
    %642 = vmatpush2.msra.mxu0 0.0
    %643 = vmatprep.subr.mxu0 0.0
    %644 = vmatpush2.msra.mxu0 0.0
    %645 = vmatprep.mubr.f32.mxu0 0.0
    %646 = vmatmul.mubr.f32.gmra.mxu0 %v505
    %v647 = vpop.f32.mrf.mxu0
    %v648 = vadd.f32 0.0, %v647
    %v649 = vpop.f32.mrf.mxu0
    %650 = vdwg.mxu0
    %v651 = vld [vmem:[#allocation25] sm:$0xff]
    %v652 = vld [vmem:[#allocation25 + $0x8] sm:$0xff]
    %v653 = vld [vmem:[#allocation25 + $0x10] sm:$0xff]
    %v654 = vld [vmem:[#allocation25 + $0x18] sm:$0xff]
    %655 = vmatprep.subr.mxu0 0.0
    %656 = vmatpush1.msra.mxu0 0.0
    %657 = vmatprep.subr.mxu0 0.0
    %658 = vmatpush1.msra.mxu0 0.0
    %659 = vmatprep.subr.mxu0 0.0
    %660 = vmatpush1.msra.mxu0 0.0
    %661 = vmatprep.subr.mxu0 0.0
    %662 = vmatpush1.msra.mxu0 0.0
    %663 = vmatprep.subr.mxu0 0.0
    %664 = vmatpush1.msra.mxu0 0.0
    %665 = vmatprep.subr.mxu0 0.0
    %666 = vmatpush1.msra.mxu0 0.0
    %667 = vmatprep.subr.mxu0 0.0
    %668 = vmatpush1.msra.mxu0 0.0
    %669 = vmatprep.subr.mxu0 0.0
    %670 = vmatpush1.msra.mxu0 0.0
    %671 = vmatprep.subr.mxu0 0.0
    %672 = vmatpush1.msra.mxu0 0.0
    %673 = vmatprep.subr.mxu0 0.0
    %674 = vmatpush1.msra.mxu0 0.0
    %675 = vmatprep.subr.mxu0 0.0
    %676 = vmatpush1.msra.mxu0 0.0
    %677 = vmatprep.subr.mxu0 0.0
    %678 = vmatpush1.msra.mxu0 0.0
    %679 = vmatprep.subr.mxu0 0.0
    %680 = vmatpush1.msra.mxu0 %v654
    %681 = vmatprep.subr.mxu0 0.0
    %682 = vmatpush1.msra.mxu0 %v653
    %683 = vmatprep.subr.mxu0 0.0
    %684 = vmatpush1.msra.mxu0 %v652
    %685 = vmatprep.subr.mxu0 0.0
    %686 = vmatpush1.msra.mxu0 %v651
    %687 = vmatprep.subr.mxu0 0.0
    %688 = vmatpush2.msra.mxu0 0.0
    %689 = vmatprep.subr.mxu0 0.0
    %690 = vmatpush2.msra.mxu0 0.0
    %691 = vmatprep.subr.mxu0 0.0
    %692 = vmatpush2.msra.mxu0 0.0
    %693 = vmatprep.subr.mxu0 0.0
    %694 = vmatpush2.msra.mxu0 0.0
    %695 = vmatprep.subr.mxu0 0.0
    %696 = vmatpush2.msra.mxu0 0.0
    %697 = vmatprep.subr.mxu0 0.0
    %698 = vmatpush2.msra.mxu0 0.0
    %699 = vmatprep.subr.mxu0 0.0
    %700 = vmatpush2.msra.mxu0 0.0
    %701 = vmatprep.subr.mxu0 0.0
    %702 = vmatpush2.msra.mxu0 0.0
    %703 = vmatprep.subr.mxu0 0.0
    %704 = vmatpush2.msra.mxu0 0.0
    %705 = vmatprep.subr.mxu0 0.0
    %706 = vmatpush2.msra.mxu0 0.0
    %707 = vmatprep.subr.mxu0 0.0
    %708 = vmatpush2.msra.mxu0 0.0
    %709 = vmatprep.subr.mxu0 0.0
    %710 = vmatpush2.msra.mxu0 0.0
    %711 = vmatprep.subr.mxu0 0.0
    %712 = vmatpush2.msra.mxu0 0.0
    %713 = vmatprep.subr.mxu0 0.0
    %714 = vmatpush2.msra.mxu0 0.0
    %715 = vmatprep.subr.mxu0 0.0
    %716 = vmatpush2.msra.mxu0 0.0
    %717 = vmatprep.subr.mxu0 0.0
    %718 = vmatpush2.msra.mxu0 0.0
    %719 = vmatprep.mubr.f32.mxu0 0.0
    %720 = vmatmul.mubr.f32.gmra.mxu0 %v505
    %v721 = vpop.f32.mrf.mxu0
    %v722 = vadd.f32 0.0, %v721
    %v723 = vpop.f32.mrf.mxu0
    %724 = vdwg.mxu0
    %v725 = vld [vmem:[#allocation10] sm:$0xff]
    %v726 = vmul.f32 %v423, %v725
    %v727 = vld [vmem:[#allocation11] sm:$0xff]
    %v728 = vmul.f32 %v497, %v727
    %v729 = vadd.f32 %v726, %v728
    %v730 = vld [vmem:[#allocation13] sm:$0xff]
    %v731 = vmul.f32 %v574, %v730
    %v732 = vld [vmem:[#allocation14] sm:$0xff]
    %v733 = vmul.f32 %v648, %v732
    %v734 = vadd.f32 %v731, %v733
    %v735 = vld [vmem:[#allocation16] sm:$0xf]
    %v738 = vunpack.c.l.s4 1966171168
    %v739 = vunpack.c.0.s8 %v738
    %v740 = vlaneseq
    %v741 = vshrl.u32 %v740, 7
    %v742 = vsub.s32 %v739, %v741
    %v743 = vrot.slane %v735, %v742
    %v744 = vcombine.high %v743, %v743
    %v746 = vunpack.c.l.s4 1966171168
    %v747 = vunpack.c.0.s8 %v746
    %v748 = vlaneseq
    %v749 = vshrl.u32 %v748, 7
    %v750 = vsub.s32 %v747, %v749
    %v751 = vrot.slane %v743, %v750
    %v753 = vunpack.c.l.s4 1966171168
    %v754 = vunpack.c.0.s8 %v753
    %v755 = vlaneseq
    %v756 = vshrl.u32 %v755, 7
    %v757 = vsub.s32 %v754, %v756
    %v758 = vrot.slane %v744, %v757
    %v759 = vcombine.high %v751, %v751
    %v760 = vcombine.high %v758, %v758
    %v761 = vlaneseq
    %v762 = vshrl.u32 %v761, 7
    %v763 = vsub.s32 0, %v762
    %v764 = vrot.slane %v751, %v763
    %v765 = vlaneseq
    %v766 = vshrl.u32 %v765, 7
    %v767 = vsub.s32 0, %v766
    %v768 = vrot.slane %v758, %v767
    %v769 = vlaneseq
    %v770 = vshrl.u32 %v769, 7
    %v771 = vsub.s32 0, %v770
    %v772 = vrot.slane %v759, %v771
    %v773 = vlaneseq
    %v774 = vshrl.u32 %v773, 7
    %v775 = vsub.s32 0, %v774
    %v776 = vrot.slane %v760, %v775
    %v781 = vmul.f32 %v764, %v729
    %v782 = vmul.f32 %v768, %v729
    %v783 = vmul.f32 %v772, %v729
    %v784 = vmul.f32 %v776, %v729
    %v785 = vmul.f32 %v764, %v722
    %v786 = vmul.f32 %v768, %v722
    %v787 = vmul.f32 %v772, %v722
    %v788 = vmul.f32 %v776, %v722
    %v790 = vsel %vm305, %v781, 0
    %v793 = vsel %vm305, %v734, 0
    %795 = vmatprep.subr.mxu0 0.0
    %796 = vmatpush1.xpose.msra.mxu0 0.0
    %797 = vmatprep.subr.mxu0 0.0
    %798 = vmatpush1.xpose.msra.mxu0 0.0
    %799 = vmatprep.subr.mxu0 0.0
    %800 = vmatpush1.xpose.msra.mxu0 0.0
    %801 = vmatprep.subr.mxu0 0.0
    %802 = vmatpush1.xpose.msra.mxu0 0.0
    %803 = vmatprep.subr.mxu0 0.0
    %804 = vmatpush1.xpose.msra.mxu0 0.0
    %805 = vmatprep.subr.mxu0 0.0
    %806 = vmatpush1.xpose.msra.mxu0 0.0
    %807 = vmatprep.subr.mxu0 0.0
    %808 = vmatpush1.xpose.msra.mxu0 0.0
    %809 = vmatprep.subr.mxu0 0.0
    %810 = vmatpush1.xpose.msra.mxu0 0.0
    %811 = vmatprep.subr.mxu0 0.0
    %812 = vmatpush1.xpose.msra.mxu0 0.0
    %813 = vmatprep.subr.mxu0 0.0
    %814 = vmatpush1.xpose.msra.mxu0 0.0
    %815 = vmatprep.subr.mxu0 0.0
    %816 = vmatpush1.xpose.msra.mxu0 0.0
    %817 = vmatprep.subr.mxu0 0.0
    %818 = vmatpush1.xpose.msra.mxu0 0.0
    %819 = vmatprep.subr.mxu0 0.0
    %820 = vmatpush1.xpose.msra.mxu0 0.0
    %821 = vmatprep.subr.mxu0 0.0
    %822 = vmatpush1.xpose.msra.mxu0 0.0
    %823 = vmatprep.subr.mxu0 0.0
    %824 = vmatpush1.xpose.msra.mxu0 0.0
    %825 = vmatprep.subr.mxu0 0.0
    %826 = vmatpush1.xpose.msra.mxu0 %v793
    %827 = vmatprep.subr.mxu0 0.0
    %828 = vmatpush2.xpose.msra.mxu0 0.0
    %829 = vmatprep.subr.mxu0 0.0
    %830 = vmatpush2.xpose.msra.mxu0 0.0
    %831 = vmatprep.subr.mxu0 0.0
    %832 = vmatpush2.xpose.msra.mxu0 0.0
    %833 = vmatprep.subr.mxu0 0.0
    %834 = vmatpush2.xpose.msra.mxu0 0.0
    %835 = vmatprep.subr.mxu0 0.0
    %836 = vmatpush2.xpose.msra.mxu0 0.0
    %837 = vmatprep.subr.mxu0 0.0
    %838 = vmatpush2.xpose.msra.mxu0 0.0
    %839 = vmatprep.subr.mxu0 0.0
    %840 = vmatpush2.xpose.msra.mxu0 0.0
    %841 = vmatprep.subr.mxu0 0.0
    %842 = vmatpush2.xpose.msra.mxu0 0.0
    %843 = vmatprep.subr.mxu0 0.0
    %844 = vmatpush2.xpose.msra.mxu0 0.0
    %845 = vmatprep.subr.mxu0 0.0
    %846 = vmatpush2.xpose.msra.mxu0 0.0
    %847 = vmatprep.subr.mxu0 0.0
    %848 = vmatpush2.xpose.msra.mxu0 0.0
    %849 = vmatprep.subr.mxu0 0.0
    %850 = vmatpush2.xpose.msra.mxu0 0.0
    %851 = vmatprep.subr.mxu0 0.0
    %852 = vmatpush2.xpose.msra.mxu0 0.0
    %853 = vmatprep.subr.mxu0 0.0
    %854 = vmatpush2.xpose.msra.mxu0 0.0
    %855 = vmatprep.subr.mxu0 0.0
    %856 = vmatpush2.xpose.msra.mxu0 0.0
    %857 = vmatprep.subr.mxu0 0.0
    %858 = vmatpush2.xpose.msra.mxu0 0.0
    %859 = vmatprep.mubr.f32.mxu0 0.0
    %860 = vmatmul.mubr.f32.gmra.mxu0 %v790
    %v861 = vpop.f32.mrf.mxu0
    %v862 = vadd.f32 0.0, %v861
    %v863 = vpop.f32.mrf.mxu0
    %864 = vdwg.mxu0
    %v866 = vsel %vm305, %v782, 0
    %868 = vmatprep.subr.mxu0 0.0
    %869 = vmatpush1.xpose.msra.mxu0 0.0
    %870 = vmatprep.subr.mxu0 0.0
    %871 = vmatpush1.xpose.msra.mxu0 0.0
    %872 = vmatprep.subr.mxu0 0.0
    %873 = vmatpush1.xpose.msra.mxu0 0.0
    %874 = vmatprep.subr.mxu0 0.0
    %875 = vmatpush1.xpose.msra.mxu0 0.0
    %876 = vmatprep.subr.mxu0 0.0
    %877 = vmatpush1.xpose.msra.mxu0 0.0
    %878 = vmatprep.subr.mxu0 0.0
    %879 = vmatpush1.xpose.msra.mxu0 0.0
    %880 = vmatprep.subr.mxu0 0.0
    %881 = vmatpush1.xpose.msra.mxu0 0.0
    %882 = vmatprep.subr.mxu0 0.0
    %883 = vmatpush1.xpose.msra.mxu0 0.0
    %884 = vmatprep.subr.mxu0 0.0
    %885 = vmatpush1.xpose.msra.mxu0 0.0
    %886 = vmatprep.subr.mxu0 0.0
    %887 = vmatpush1.xpose.msra.mxu0 0.0
    %888 = vmatprep.subr.mxu0 0.0
    %889 = vmatpush1.xpose.msra.mxu0 0.0
    %890 = vmatprep.subr.mxu0 0.0
    %891 = vmatpush1.xpose.msra.mxu0 0.0
    %892 = vmatprep.subr.mxu0 0.0
    %893 = vmatpush1.xpose.msra.mxu0 0.0
    %894 = vmatprep.subr.mxu0 0.0
    %895 = vmatpush1.xpose.msra.mxu0 0.0
    %896 = vmatprep.subr.mxu0 0.0
    %897 = vmatpush1.xpose.msra.mxu0 0.0
    %898 = vmatprep.subr.mxu0 0.0
    %899 = vmatpush1.xpose.msra.mxu0 %v793
    %900 = vmatprep.subr.mxu0 0.0
    %901 = vmatpush2.xpose.msra.mxu0 0.0
    %902 = vmatprep.subr.mxu0 0.0
    %903 = vmatpush2.xpose.msra.mxu0 0.0
    %904 = vmatprep.subr.mxu0 0.0
    %905 = vmatpush2.xpose.msra.mxu0 0.0
    %906 = vmatprep.subr.mxu0 0.0
    %907 = vmatpush2.xpose.msra.mxu0 0.0
    %908 = vmatprep.subr.mxu0 0.0
    %909 = vmatpush2.xpose.msra.mxu0 0.0
    %910 = vmatprep.subr.mxu0 0.0
    %911 = vmatpush2.xpose.msra.mxu0 0.0
    %912 = vmatprep.subr.mxu0 0.0
    %913 = vmatpush2.xpose.msra.mxu0 0.0
    %914 = vmatprep.subr.mxu0 0.0
    %915 = vmatpush2.xpose.msra.mxu0 0.0
    %916 = vmatprep.subr.mxu0 0.0
    %917 = vmatpush2.xpose.msra.mxu0 0.0
    %918 = vmatprep.subr.mxu0 0.0
    %919 = vmatpush2.xpose.msra.mxu0 0.0
    %920 = vmatprep.subr.mxu0 0.0
    %921 = vmatpush2.xpose.msra.mxu0 0.0
    %922 = vmatprep.subr.mxu0 0.0
    %923 = vmatpush2.xpose.msra.mxu0 0.0
    %924 = vmatprep.subr.mxu0 0.0
    %925 = vmatpush2.xpose.msra.mxu0 0.0
    %926 = vmatprep.subr.mxu0 0.0
    %927 = vmatpush2.xpose.msra.mxu0 0.0
    %928 = vmatprep.subr.mxu0 0.0
    %929 = vmatpush2.xpose.msra.mxu0 0.0
    %930 = vmatprep.subr.mxu0 0.0
    %931 = vmatpush2.xpose.msra.mxu0 0.0
    %932 = vmatprep.mubr.f32.mxu0 0.0
    %933 = vmatmul.mubr.f32.gmra.mxu0 %v866
    %v934 = vpop.f32.mrf.mxu0
    %v935 = vadd.f32 0.0, %v934
    %v936 = vpop.f32.mrf.mxu0
    %937 = vdwg.mxu0
    %v939 = vsel %vm305, %v783, 0
    %941 = vmatprep.subr.mxu0 0.0
    %942 = vmatpush1.xpose.msra.mxu0 0.0
    %943 = vmatprep.subr.mxu0 0.0
    %944 = vmatpush1.xpose.msra.mxu0 0.0
    %945 = vmatprep.subr.mxu0 0.0
    %946 = vmatpush1.xpose.msra.mxu0 0.0
    %947 = vmatprep.subr.mxu0 0.0
    %948 = vmatpush1.xpose.msra.mxu0 0.0
    %949 = vmatprep.subr.mxu0 0.0
    %950 = vmatpush1.xpose.msra.mxu0 0.0
    %951 = vmatprep.subr.mxu0 0.0
    %952 = vmatpush1.xpose.msra.mxu0 0.0
    %953 = vmatprep.subr.mxu0 0.0
    %954 = vmatpush1.xpose.msra.mxu0 0.0
    %955 = vmatprep.subr.mxu0 0.0
    %956 = vmatpush1.xpose.msra.mxu0 0.0
    %957 = vmatprep.subr.mxu0 0.0
    %958 = vmatpush1.xpose.msra.mxu0 0.0
    %959 = vmatprep.subr.mxu0 0.0
    %960 = vmatpush1.xpose.msra.mxu0 0.0
    %961 = vmatprep.subr.mxu0 0.0
    %962 = vmatpush1.xpose.msra.mxu0 0.0
    %963 = vmatprep.subr.mxu0 0.0
    %964 = vmatpush1.xpose.msra.mxu0 0.0
    %965 = vmatprep.subr.mxu0 0.0
    %966 = vmatpush1.xpose.msra.mxu0 0.0
    %967 = vmatprep.subr.mxu0 0.0
    %968 = vmatpush1.xpose.msra.mxu0 0.0
    %969 = vmatprep.subr.mxu0 0.0
    %970 = vmatpush1.xpose.msra.mxu0 0.0
    %971 = vmatprep.subr.mxu0 0.0
    %972 = vmatpush1.xpose.msra.mxu0 %v793
    %973 = vmatprep.subr.mxu0 0.0
    %974 = vmatpush2.xpose.msra.mxu0 0.0
    %975 = vmatprep.subr.mxu0 0.0
    %976 = vmatpush2.xpose.msra.mxu0 0.0
    %977 = vmatprep.subr.mxu0 0.0
    %978 = vmatpush2.xpose.msra.mxu0 0.0
    %979 = vmatprep.subr.mxu0 0.0
    %980 = vmatpush2.xpose.msra.mxu0 0.0
    %981 = vmatprep.subr.mxu0 0.0
    %982 = vmatpush2.xpose.msra.mxu0 0.0
    %983 = vmatprep.subr.mxu0 0.0
    %984 = vmatpush2.xpose.msra.mxu0 0.0
    %985 = vmatprep.subr.mxu0 0.0
    %986 = vmatpush2.xpose.msra.mxu0 0.0
    %987 = vmatprep.subr.mxu0 0.0
    %988 = vmatpush2.xpose.msra.mxu0 0.0
    %989 = vmatprep.subr.mxu0 0.0
    %990 = vmatpush2.xpose.msra.mxu0 0.0
    %991 = vmatprep.subr.mxu0 0.0
    %992 = vmatpush2.xpose.msra.mxu0 0.0
    %993 = vmatprep.subr.mxu0 0.0
    %994 = vmatpush2.xpose.msra.mxu0 0.0
    %995 = vmatprep.subr.mxu0 0.0
    %996 = vmatpush2.xpose.msra.mxu0 0.0
    %997 = vmatprep.subr.mxu0 0.0
    %998 = vmatpush2.xpose.msra.mxu0 0.0
    %999 = vmatprep.subr.mxu0 0.0
    %1000 = vmatpush2.xpose.msra.mxu0 0.0
    %1001 = vmatprep.subr.mxu0 0.0
    %1002 = vmatpush2.xpose.msra.mxu0 0.0
    %1003 = vmatprep.subr.mxu0 0.0
    %1004 = vmatpush2.xpose.msra.mxu0 0.0
    %1005 = vmatprep.mubr.f32.mxu0 0.0
    %1006 = vmatmul.mubr.f32.gmra.mxu0 %v939
    %v1007 = vpop.f32.mrf.mxu0
    %v1008 = vadd.f32 0.0, %v1007
    %v1009 = vpop.f32.mrf.mxu0
    %1010 = vdwg.mxu0
    %v1012 = vsel %vm305, %v784, 0
    %1014 = vmatprep.subr.mxu0 0.0
    %1015 = vmatpush1.xpose.msra.mxu0 0.0
    %1016 = vmatprep.subr.mxu0 0.0
    %1017 = vmatpush1.xpose.msra.mxu0 0.0
    %1018 = vmatprep.subr.mxu0 0.0
    %1019 = vmatpush1.xpose.msra.mxu0 0.0
    %1020 = vmatprep.subr.mxu0 0.0
    %1021 = vmatpush1.xpose.msra.mxu0 0.0
    %1022 = vmatprep.subr.mxu0 0.0
    %1023 = vmatpush1.xpose.msra.mxu0 0.0
    %1024 = vmatprep.subr.mxu0 0.0
    %1025 = vmatpush1.xpose.msra.mxu0 0.0
    %1026 = vmatprep.subr.mxu0 0.0
    %1027 = vmatpush1.xpose.msra.mxu0 0.0
    %1028 = vmatprep.subr.mxu0 0.0
    %1029 = vmatpush1.xpose.msra.mxu0 0.0
    %1030 = vmatprep.subr.mxu0 0.0
    %1031 = vmatpush1.xpose.msra.mxu0 0.0
    %1032 = vmatprep.subr.mxu0 0.0
    %1033 = vmatpush1.xpose.msra.mxu0 0.0
    %1034 = vmatprep.subr.mxu0 0.0
    %1035 = vmatpush1.xpose.msra.mxu0 0.0
    %1036 = vmatprep.subr.mxu0 0.0
    %1037 = vmatpush1.xpose.msra.mxu0 0.0
    %1038 = vmatprep.subr.mxu0 0.0
    %1039 = vmatpush1.xpose.msra.mxu0 0.0
    %1040 = vmatprep.subr.mxu0 0.0
    %1041 = vmatpush1.xpose.msra.mxu0 0.0
    %1042 = vmatprep.subr.mxu0 0.0
    %1043 = vmatpush1.xpose.msra.mxu0 0.0
    %1044 = vmatprep.subr.mxu0 0.0
    %1045 = vmatpush1.xpose.msra.mxu0 %v793
    %1046 = vmatprep.subr.mxu0 0.0
    %1047 = vmatpush2.xpose.msra.mxu0 0.0
    %1048 = vmatprep.subr.mxu0 0.0
    %1049 = vmatpush2.xpose.msra.mxu0 0.0
    %1050 = vmatprep.subr.mxu0 0.0
    %1051 = vmatpush2.xpose.msra.mxu0 0.0
    %1052 = vmatprep.subr.mxu0 0.0
    %1053 = vmatpush2.xpose.msra.mxu0 0.0
    %1054 = vmatprep.subr.mxu0 0.0
    %1055 = vmatpush2.xpose.msra.mxu0 0.0
    %1056 = vmatprep.subr.mxu0 0.0
    %1057 = vmatpush2.xpose.msra.mxu0 0.0
    %1058 = vmatprep.subr.mxu0 0.0
    %1059 = vmatpush2.xpose.msra.mxu0 0.0
    %1060 = vmatprep.subr.mxu0 0.0
    %1061 = vmatpush2.xpose.msra.mxu0 0.0
    %1062 = vmatprep.subr.mxu0 0.0
    %1063 = vmatpush2.xpose.msra.mxu0 0.0
    %1064 = vmatprep.subr.mxu0 0.0
    %1065 = vmatpush2.xpose.msra.mxu0 0.0
    %1066 = vmatprep.subr.mxu0 0.0
    %1067 = vmatpush2.xpose.msra.mxu0 0.0
    %1068 = vmatprep.subr.mxu0 0.0
    %1069 = vmatpush2.xpose.msra.mxu0 0.0
    %1070 = vmatprep.subr.mxu0 0.0
    %1071 = vmatpush2.xpose.msra.mxu0 0.0
    %1072 = vmatprep.subr.mxu0 0.0
    %1073 = vmatpush2.xpose.msra.mxu0 0.0
    %1074 = vmatprep.subr.mxu0 0.0
    %1075 = vmatpush2.xpose.msra.mxu0 0.0
    %1076 = vmatprep.subr.mxu0 0.0
    %1077 = vmatpush2.xpose.msra.mxu0 0.0
    %1078 = vmatprep.mubr.f32.mxu0 0.0
    %1079 = vmatmul.mubr.f32.gmra.mxu0 %v1012
    %v1080 = vpop.f32.mrf.mxu0
    %v1081 = vadd.f32 0.0, %v1080
    %v1082 = vpop.f32.mrf.mxu0
    %1083 = vdwg.mxu0
    %v1084 = vmul.f32 %v862, 0.35355338
    %v1085 = vmul.f32 %v935, 0.35355338
    %v1086 = vmul.f32 %v1008, 0.35355338
    %v1087 = vmul.f32 %v1081, 0.35355338
    %v1088 = vld [vmem:[%s2] sm:$0xff]
    %v1089 = vld [vmem:[#allocation7] sm:$0x1]
    %1090 = vset.pattern.permute.xlu0 0
    %1091 = vperm.xlu0 %1090, %v1088
    %v1092 = vpop.permute.xlu0 %1091
    %v1093 = vlaneseq
    %v1094 = vshrl.u32 %v1093, 7
    %v1095 = vsub.s32 0, %v1094
    %v1096 = vrot.slane %v1089, %v1095
    %vm1097 = vcmp.eq.s32.totalorder %v1092, %v1096
    %v1098 = vsel %vm1097, 0.0, -1e+09
    %v1099 = vadd.f32 %v1084, %v1098
    %v1100 = vadd.f32 %v1085, %v1098
    %v1101 = vadd.f32 %v1086, %v1098
    %v1102 = vadd.f32 %v1087, %v1098
    %v1103 = vld [vmem:[#allocation8] sm:$0x1]
    %v1105 = vlaneseq
    %v1106 = vshrl.u32 %v1105, 7
    %v1107 = vsub.s32 0, %v1106
    %v1108 = vrot.slane %v1103, %v1107
    %v1110 = vadd.f32 %v1099, %v1108
    %v1111 = vadd.f32 %v1100, %v1108
    %v1112 = vadd.f32 %v1101, %v1108
    %v1113 = vadd.f32 %v1102, %v1108
    %vm1114 = vcmask 64512
    %v1115 = vsel %vm1114, %v1110, -inf
    %1116 = vmax.xlane.f32.xlu0 %v1115
    %v1117 = vpop.xlane.xlu0 %1116
    %v1118 = vsel %vm1114, %v1111, -inf
    %1119 = vmax.xlane.f32.xlu0 %v1118
    %v1120 = vpop.xlane.xlu0 %1119
    %v1121 = vsel %vm1114, %v1112, -inf
    %1122 = vmax.xlane.f32.xlu0 %v1121
    %v1123 = vpop.xlane.xlu0 %1122
    %v1124 = vsel %vm1114, %v1113, -inf
    %1125 = vmax.xlane.f32.xlu0 %v1124
    %v1126 = vpop.xlane.xlu0 %1125
    %v1127 = vsub.f32 %v1110, %v1117
    %v1128 = vsub.f32 %v1111, %v1120
    %v1129 = vsub.f32 %v1112, %v1123
    %v1130 = vsub.f32 %v1113, %v1126
    %v1131 = vmul.f32 %v1127, 1.442695
    %v1132 = vpow.pop %v1131
    %v1133 = vmul.f32 %v1128, 1.442695
    %v1134 = vpow.pop %v1133
    %v1135 = vmul.f32 %v1129, 1.442695
    %v1136 = vpow.pop %v1135
    %v1137 = vmul.f32 %v1130, 1.442695
    %v1138 = vpow.pop %v1137
    %v1139 = vsel %vm1114, %v1132, 0.0
    %1140 = vadd.xlane.f32.xlu0 %v1139
    %v1141 = vpop.xlane.xlu0 %1140
    %v1142 = vsel %vm1114, %v1134, 0.0
    %1143 = vadd.xlane.f32.xlu0 %v1142
    %v1144 = vpop.xlane.xlu0 %1143
    %v1145 = vsel %vm1114, %v1136, 0.0
    %1146 = vadd.xlane.f32.xlu0 %v1145
    %v1147 = vpop.xlane.xlu0 %1146
    %v1148 = vsel %vm1114, %v1138, 0.0
    %1149 = vadd.xlane.f32.xlu0 %v1148
    %v1150 = vpop.xlane.xlu0 %1149
    %v1151 = vrcp.pop %v1141
    %v1152 = vrcp.pop %v1144
    %v1153 = vrcp.pop %v1147
    %v1154 = vrcp.pop %v1150
    %v1155 = vmul.f32 %v1132, %v1151
    %v1156 = vmul.f32 %v1134, %v1152
    %v1157 = vmul.f32 %v1136, %v1153
    %v1158 = vmul.f32 %v1138, %v1154
    %v1160 = vsel %vm1114, %v1155, 0
    %1162 = vmatprep.subr.mxu0 0.0
    %1163 = vmatpush1.msra.mxu0 0.0
    %1164 = vmatprep.subr.mxu0 0.0
    %1165 = vmatpush1.msra.mxu0 0.0
    %1166 = vmatprep.subr.mxu0 0.0
    %1167 = vmatpush1.msra.mxu0 0.0
    %1168 = vmatprep.subr.mxu0 0.0
    %1169 = vmatpush1.msra.mxu0 0.0
    %1170 = vmatprep.subr.mxu0 0.0
    %1171 = vmatpush1.msra.mxu0 0.0
    %1172 = vmatprep.subr.mxu0 0.0
    %1173 = vmatpush1.msra.mxu0 0.0
    %1174 = vmatprep.subr.mxu0 0.0
    %1175 = vmatpush1.msra.mxu0 0.0
    %1176 = vmatprep.subr.mxu0 0.0
    %1177 = vmatpush1.msra.mxu0 0.0
    %1178 = vmatprep.subr.mxu0 0.0
    %1179 = vmatpush1.msra.mxu0 0.0
    %1180 = vmatprep.subr.mxu0 0.0
    %1181 = vmatpush1.msra.mxu0 0.0
    %1182 = vmatprep.subr.mxu0 0.0
    %1183 = vmatpush1.msra.mxu0 0.0
    %1184 = vmatprep.subr.mxu0 0.0
    %1185 = vmatpush1.msra.mxu0 0.0
    %1186 = vmatprep.subr.mxu0 0.0
    %1187 = vmatpush1.msra.mxu0 0.0
    %1188 = vmatprep.subr.mxu0 0.0
    %1189 = vmatpush1.msra.mxu0 0.0
    %1190 = vmatprep.subr.mxu0 0.0
    %1191 = vmatpush1.msra.mxu0 0.0
    %1192 = vmatprep.subr.mxu0 0.0
    %1193 = vmatpush1.msra.mxu0 %v785
    %1194 = vmatprep.subr.mxu0 0.0
    %1195 = vmatpush2.msra.mxu0 0.0
    %1196 = vmatprep.subr.mxu0 0.0
    %1197 = vmatpush2.msra.mxu0 0.0
    %1198 = vmatprep.subr.mxu0 0.0
    %1199 = vmatpush2.msra.mxu0 0.0
    %1200 = vmatprep.subr.mxu0 0.0
    %1201 = vmatpush2.msra.mxu0 0.0
    %1202 = vmatprep.subr.mxu0 0.0
    %1203 = vmatpush2.msra.mxu0 0.0
    %1204 = vmatprep.subr.mxu0 0.0
    %1205 = vmatpush2.msra.mxu0 0.0
    %1206 = vmatprep.subr.mxu0 0.0
    %1207 = vmatpush2.msra.mxu0 0.0
    %1208 = vmatprep.subr.mxu0 0.0
    %1209 = vmatpush2.msra.mxu0 0.0
    %1210 = vmatprep.subr.mxu0 0.0
    %1211 = vmatpush2.msra.mxu0 0.0
    %1212 = vmatprep.subr.mxu0 0.0
    %1213 = vmatpush2.msra.mxu0 0.0
    %1214 = vmatprep.subr.mxu0 0.0
    %1215 = vmatpush2.msra.mxu0 0.0
    %1216 = vmatprep.subr.mxu0 0.0
    %1217 = vmatpush2.msra.mxu0 0.0
    %1218 = vmatprep.subr.mxu0 0.0
    %1219 = vmatpush2.msra.mxu0 0.0
    %1220 = vmatprep.subr.mxu0 0.0
    %1221 = vmatpush2.msra.mxu0 0.0
    %1222 = vmatprep.subr.mxu0 0.0
    %1223 = vmatpush2.msra.mxu0 0.0
    %1224 = vmatprep.subr.mxu0 0.0
    %1225 = vmatpush2.msra.mxu0 0.0
    %1226 = vmatprep.mubr.f32.mxu0 0.0
    %1227 = vmatmul.mubr.f32.gmra.mxu0 %v1160
    %v1228 = vpop.f32.mrf.mxu0
    %v1229 = vadd.f32 0.0, %v1228
    %v1230 = vpop.f32.mrf.mxu0
    %1231 = vdwg.mxu0
    %v1233 = vsel %vm1114, %v1156, 0
    %1235 = vmatprep.subr.mxu0 0.0
    %1236 = vmatpush1.msra.mxu0 0.0
    %1237 = vmatprep.subr.mxu0 0.0
    %1238 = vmatpush1.msra.mxu0 0.0
    %1239 = vmatprep.subr.mxu0 0.0
    %1240 = vmatpush1.msra.mxu0 0.0
    %1241 = vmatprep.subr.mxu0 0.0
    %1242 = vmatpush1.msra.mxu0 0.0
    %1243 = vmatprep.subr.mxu0 0.0
    %1244 = vmatpush1.msra.mxu0 0.0
    %1245 = vmatprep.subr.mxu0 0.0
    %1246 = vmatpush1.msra.mxu0 0.0
    %1247 = vmatprep.subr.mxu0 0.0
    %1248 = vmatpush1.msra.mxu0 0.0
    %1249 = vmatprep.subr.mxu0 0.0
    %1250 = vmatpush1.msra.mxu0 0.0
    %1251 = vmatprep.subr.mxu0 0.0
    %1252 = vmatpush1.msra.mxu0 0.0
    %1253 = vmatprep.subr.mxu0 0.0
    %1254 = vmatpush1.msra.mxu0 0.0
    %1255 = vmatprep.subr.mxu0 0.0
    %1256 = vmatpush1.msra.mxu0 0.0
    %1257 = vmatprep.subr.mxu0 0.0
    %1258 = vmatpush1.msra.mxu0 0.0
    %1259 = vmatprep.subr.mxu0 0.0
    %1260 = vmatpush1.msra.mxu0 0.0
    %1261 = vmatprep.subr.mxu0 0.0
    %1262 = vmatpush1.msra.mxu0 0.0
    %1263 = vmatprep.subr.mxu0 0.0
    %1264 = vmatpush1.msra.mxu0 0.0
    %1265 = vmatprep.subr.mxu0 0.0
    %1266 = vmatpush1.msra.mxu0 %v786
    %1267 = vmatprep.subr.mxu0 0.0
    %1268 = vmatpush2.msra.mxu0 0.0
    %1269 = vmatprep.subr.mxu0 0.0
    %1270 = vmatpush2.msra.mxu0 0.0
    %1271 = vmatprep.subr.mxu0 0.0
    %1272 = vmatpush2.msra.mxu0 0.0
    %1273 = vmatprep.subr.mxu0 0.0
    %1274 = vmatpush2.msra.mxu0 0.0
    %1275 = vmatprep.subr.mxu0 0.0
    %1276 = vmatpush2.msra.mxu0 0.0
    %1277 = vmatprep.subr.mxu0 0.0
    %1278 = vmatpush2.msra.mxu0 0.0
    %1279 = vmatprep.subr.mxu0 0.0
    %1280 = vmatpush2.msra.mxu0 0.0
    %1281 = vmatprep.subr.mxu0 0.0
    %1282 = vmatpush2.msra.mxu0 0.0
    %1283 = vmatprep.subr.mxu0 0.0
    %1284 = vmatpush2.msra.mxu0 0.0
    %1285 = vmatprep.subr.mxu0 0.0
    %1286 = vmatpush2.msra.mxu0 0.0
    %1287 = vmatprep.subr.mxu0 0.0
    %1288 = vmatpush2.msra.mxu0 0.0
    %1289 = vmatprep.subr.mxu0 0.0
    %1290 = vmatpush2.msra.mxu0 0.0
    %1291 = vmatprep.subr.mxu0 0.0
    %1292 = vmatpush2.msra.mxu0 0.0
    %1293 = vmatprep.subr.mxu0 0.0
    %1294 = vmatpush2.msra.mxu0 0.0
    %1295 = vmatprep.subr.mxu0 0.0
    %1296 = vmatpush2.msra.mxu0 0.0
    %1297 = vmatprep.subr.mxu0 0.0
    %1298 = vmatpush2.msra.mxu0 0.0
    %1299 = vmatprep.mubr.f32.mxu0 0.0
    %1300 = vmatmul.mubr.f32.gmra.mxu0 %v1233
    %v1301 = vpop.f32.mrf.mxu0
    %v1302 = vadd.f32 0.0, %v1301
    %v1303 = vpop.f32.mrf.mxu0
    %1304 = vdwg.mxu0
    %v1306 = vsel %vm1114, %v1157, 0
    %1308 = vmatprep.subr.mxu0 0.0
    %1309 = vmatpush1.msra.mxu0 0.0
    %1310 = vmatprep.subr.mxu0 0.0
    %1311 = vmatpush1.msra.mxu0 0.0
    %1312 = vmatprep.subr.mxu0 0.0
    %1313 = vmatpush1.msra.mxu0 0.0
    %1314 = vmatprep.subr.mxu0 0.0
    %1315 = vmatpush1.msra.mxu0 0.0
    %1316 = vmatprep.subr.mxu0 0.0
    %1317 = vmatpush1.msra.mxu0 0.0
    %1318 = vmatprep.subr.mxu0 0.0
    %1319 = vmatpush1.msra.mxu0 0.0
    %1320 = vmatprep.subr.mxu0 0.0
    %1321 = vmatpush1.msra.mxu0 0.0
    %1322 = vmatprep.subr.mxu0 0.0
    %1323 = vmatpush1.msra.mxu0 0.0
    %1324 = vmatprep.subr.mxu0 0.0
    %1325 = vmatpush1.msra.mxu0 0.0
    %1326 = vmatprep.subr.mxu0 0.0
    %1327 = vmatpush1.msra.mxu0 0.0
    %1328 = vmatprep.subr.mxu0 0.0
    %1329 = vmatpush1.msra.mxu0 0.0
    %1330 = vmatprep.subr.mxu0 0.0
    %1331 = vmatpush1.msra.mxu0 0.0
    %1332 = vmatprep.subr.mxu0 0.0
    %1333 = vmatpush1.msra.mxu0 0.0
    %1334 = vmatprep.subr.mxu0 0.0
    %1335 = vmatpush1.msra.mxu0 0.0
    %1336 = vmatprep.subr.mxu0 0.0
    %1337 = vmatpush1.msra.mxu0 0.0
    %1338 = vmatprep.subr.mxu0 0.0
    %1339 = vmatpush1.msra.mxu0 %v787
    %1340 = vmatprep.subr.mxu0 0.0
    %1341 = vmatpush2.msra.mxu0 0.0
    %1342 = vmatprep.subr.mxu0 0.0
    %1343 = vmatpush2.msra.mxu0 0.0
    %1344 = vmatprep.subr.mxu0 0.0
    %1345 = vmatpush2.msra.mxu0 0.0
    %1346 = vmatprep.subr.mxu0 0.0
    %1347 = vmatpush2.msra.mxu0 0.0
    %1348 = vmatprep.subr.mxu0 0.0
    %1349 = vmatpush2.msra.mxu0 0.0
    %1350 = vmatprep.subr.mxu0 0.0
    %1351 = vmatpush2.msra.mxu0 0.0
    %1352 = vmatprep.subr.mxu0 0.0
    %1353 = vmatpush2.msra.mxu0 0.0
    %1354 = vmatprep.subr.mxu0 0.0
    %1355 = vmatpush2.msra.mxu0 0.0
    %1356 = vmatprep.subr.mxu0 0.0
    %1357 = vmatpush2.msra.mxu0 0.0
    %1358 = vmatprep.subr.mxu0 0.0
    %1359 = vmatpush2.msra.mxu0 0.0
    %1360 = vmatprep.subr.mxu0 0.0
    %1361 = vmatpush2.msra.mxu0 0.0
    %1362 = vmatprep.subr.mxu0 0.0
    %1363 = vmatpush2.msra.mxu0 0.0
    %1364 = vmatprep.subr.mxu0 0.0
    %1365 = vmatpush2.msra.mxu0 0.0
    %1366 = vmatprep.subr.mxu0 0.0
    %1367 = vmatpush2.msra.mxu0 0.0
    %1368 = vmatprep.subr.mxu0 0.0
    %1369 = vmatpush2.msra.mxu0 0.0
    %1370 = vmatprep.subr.mxu0 0.0
    %1371 = vmatpush2.msra.mxu0 0.0
    %1372 = vmatprep.mubr.f32.mxu0 0.0
    %1373 = vmatmul.mubr.f32.gmra.mxu0 %v1306
    %v1374 = vpop.f32.mrf.mxu0
    %v1375 = vadd.f32 0.0, %v1374
    %v1376 = vpop.f32.mrf.mxu0
    %1377 = vdwg.mxu0
    %v1379 = vsel %vm1114, %v1158, 0
    %1381 = vmatprep.subr.mxu0 0.0
    %1382 = vmatpush1.msra.mxu0 0.0
    %1383 = vmatprep.subr.mxu0 0.0
    %1384 = vmatpush1.msra.mxu0 0.0
    %1385 = vmatprep.subr.mxu0 0.0
    %1386 = vmatpush1.msra.mxu0 0.0
    %1387 = vmatprep.subr.mxu0 0.0
    %1388 = vmatpush1.msra.mxu0 0.0
    %1389 = vmatprep.subr.mxu0 0.0
    %1390 = vmatpush1.msra.mxu0 0.0
    %1391 = vmatprep.subr.mxu0 0.0
    %1392 = vmatpush1.msra.mxu0 0.0
    %1393 = vmatprep.subr.mxu0 0.0
    %1394 = vmatpush1.msra.mxu0 0.0
    %1395 = vmatprep.subr.mxu0 0.0
    %1396 = vmatpush1.msra.mxu0 0.0
    %1397 = vmatprep.subr.mxu0 0.0
    %1398 = vmatpush1.msra.mxu0 0.0
    %1399 = vmatprep.subr.mxu0 0.0
    %1400 = vmatpush1.msra.mxu0 0.0
    %1401 = vmatprep.subr.mxu0 0.0
    %1402 = vmatpush1.msra.mxu0 0.0
    %1403 = vmatprep.subr.mxu0 0.0
    %1404 = vmatpush1.msra.mxu0 0.0
    %1405 = vmatprep.subr.mxu0 0.0
    %1406 = vmatpush1.msra.mxu0 0.0
    %1407 = vmatprep.subr.mxu0 0.0
    %1408 = vmatpush1.msra.mxu0 0.0
    %1409 = vmatprep.subr.mxu0 0.0
    %1410 = vmatpush1.msra.mxu0 0.0
    %1411 = vmatprep.subr.mxu0 0.0
    %1412 = vmatpush1.msra.mxu0 %v788
    %1413 = vmatprep.subr.mxu0 0.0
    %1414 = vmatpush2.msra.mxu0 0.0
    %1415 = vmatprep.subr.mxu0 0.0
    %1416 = vmatpush2.msra.mxu0 0.0
    %1417 = vmatprep.subr.mxu0 0.0
    %1418 = vmatpush2.msra.mxu0 0.0
    %1419 = vmatprep.subr.mxu0 0.0
    %1420 = vmatpush2.msra.mxu0 0.0
    %1421 = vmatprep.subr.mxu0 0.0
    %1422 = vmatpush2.msra.mxu0 0.0
    %1423 = vmatprep.subr.mxu0 0.0
    %1424 = vmatpush2.msra.mxu0 0.0
    %1425 = vmatprep.subr.mxu0 0.0
    %1426 = vmatpush2.msra.mxu0 0.0
    %1427 = vmatprep.subr.mxu0 0.0
    %1428 = vmatpush2.msra.mxu0 0.0
    %1429 = vmatprep.subr.mxu0 0.0
    %1430 = vmatpush2.msra.mxu0 0.0
    %1431 = vmatprep.subr.mxu0 0.0
    %1432 = vmatpush2.msra.mxu0 0.0
    %1433 = vmatprep.subr.mxu0 0.0
    %1434 = vmatpush2.msra.mxu0 0.0
    %1435 = vmatprep.subr.mxu0 0.0
    %1436 = vmatpush2.msra.mxu0 0.0
    %1437 = vmatprep.subr.mxu0 0.0
    %1438 = vmatpush2.msra.mxu0 0.0
    %1439 = vmatprep.subr.mxu0 0.0
    %1440 = vmatpush2.msra.mxu0 0.0
    %1441 = vmatprep.subr.mxu0 0.0
    %1442 = vmatpush2.msra.mxu0 0.0
    %1443 = vmatprep.subr.mxu0 0.0
    %1444 = vmatpush2.msra.mxu0 0.0
    %1445 = vmatprep.mubr.f32.mxu0 0.0
    %1446 = vmatmul.mubr.f32.gmra.mxu0 %v1379
    %v1447 = vpop.f32.mrf.mxu0
    %v1448 = vadd.f32 0.0, %v1447
    %v1449 = vpop.f32.mrf.mxu0
    %1450 = vdwg.mxu0
    %v1451 = vsel %vm305, %v1229, 0.0
    %v1452 = vsel %vm305, %v1302, 0.0
    %v1453 = vadd.f32 %v1451, %v1452
    %v1454 = vsel %vm305, %v1375, 0.0
    %v1455 = vadd.f32 %v1453, %v1454
    %v1456 = vsel %vm305, %v1448, 0.0
    %v1457 = vadd.f32 %v1455, %v1456
    %v1458 = vld [vmem:[#allocation26] sm:$0xff]
    %v1459 = vld [vmem:[#allocation26 + $0x8] sm:$0xff]
    %v1460 = vld [vmem:[#allocation26 + $0x10] sm:$0xff]
    %v1461 = vld [vmem:[#allocation26 + $0x18] sm:$0xff]
    %v1463 = vsel %vm305, %v1457, 0
    %1465 = vmatprep.subr.mxu0 0.0
    %1466 = vmatpush1.msra.mxu0 0.0
    %1467 = vmatprep.subr.mxu0 0.0
    %1468 = vmatpush1.msra.mxu0 0.0
    %1469 = vmatprep.subr.mxu0 0.0
    %1470 = vmatpush1.msra.mxu0 0.0
    %1471 = vmatprep.subr.mxu0 0.0
    %1472 = vmatpush1.msra.mxu0 0.0
    %1473 = vmatprep.subr.mxu0 0.0
    %1474 = vmatpush1.msra.mxu0 0.0
    %1475 = vmatprep.subr.mxu0 0.0
    %1476 = vmatpush1.msra.mxu0 0.0
    %1477 = vmatprep.subr.mxu0 0.0
    %1478 = vmatpush1.msra.mxu0 0.0
    %1479 = vmatprep.subr.mxu0 0.0
    %1480 = vmatpush1.msra.mxu0 0.0
    %1481 = vmatprep.subr.mxu0 0.0
    %1482 = vmatpush1.msra.mxu0 0.0
    %1483 = vmatprep.subr.mxu0 0.0
    %1484 = vmatpush1.msra.mxu0 0.0
    %1485 = vmatprep.subr.mxu0 0.0
    %1486 = vmatpush1.msra.mxu0 0.0
    %1487 = vmatprep.subr.mxu0 0.0
    %1488 = vmatpush1.msra.mxu0 0.0
    %1489 = vmatprep.subr.mxu0 0.0
    %1490 = vmatpush1.msra.mxu0 %v1461
    %1491 = vmatprep.subr.mxu0 0.0
    %1492 = vmatpush1.msra.mxu0 %v1460
    %1493 = vmatprep.subr.mxu0 0.0
    %1494 = vmatpush1.msra.mxu0 %v1459
    %1495 = vmatprep.subr.mxu0 0.0
    %1496 = vmatpush1.msra.mxu0 %v1458
    %1497 = vmatprep.subr.mxu0 0.0
    %1498 = vmatpush2.msra.mxu0 0.0
    %1499 = vmatprep.subr.mxu0 0.0
    %1500 = vmatpush2.msra.mxu0 0.0
    %1501 = vmatprep.subr.mxu0 0.0
    %1502 = vmatpush2.msra.mxu0 0.0
    %1503 = vmatprep.subr.mxu0 0.0
    %1504 = vmatpush2.msra.mxu0 0.0
    %1505 = vmatprep.subr.mxu0 0.0
    %1506 = vmatpush2.msra.mxu0 0.0
    %1507 = vmatprep.subr.mxu0 0.0
    %1508 = vmatpush2.msra.mxu0 0.0
    %1509 = vmatprep.subr.mxu0 0.0
    %1510 = vmatpush2.msra.mxu0 0.0
    %1511 = vmatprep.subr.mxu0 0.0
    %1512 = vmatpush2.msra.mxu0 0.0
    %1513 = vmatprep.subr.mxu0 0.0
    %1514 = vmatpush2.msra.mxu0 0.0
    %1515 = vmatprep.subr.mxu0 0.0
    %1516 = vmatpush2.msra.mxu0 0.0
    %1517 = vmatprep.subr.mxu0 0.0
    %1518 = vmatpush2.msra.mxu0 0.0
    %1519 = vmatprep.subr.mxu0 0.0
    %1520 = vmatpush2.msra.mxu0 0.0
    %1521 = vmatprep.subr.mxu0 0.0
    %1522 = vmatpush2.msra.mxu0 0.0
    %1523 = vmatprep.subr.mxu0 0.0
    %1524 = vmatpush2.msra.mxu0 0.0
    %1525 = vmatprep.subr.mxu0 0.0
    %1526 = vmatpush2.msra.mxu0 0.0
    %1527 = vmatprep.subr.mxu0 0.0
    %1528 = vmatpush2.msra.mxu0 0.0
    %1529 = vmatprep.mubr.f32.mxu0 0.0
    %1530 = vmatmul.mubr.f32.gmra.mxu0 %v1463
    %v1531 = vpop.f32.mrf.mxu0
    %v1532 = vadd.f32 0.0, %v1531
    %v1533 = vpop.f32.mrf.mxu0
    %1534 = vdwg.mxu0
    %v1535 = vadd.f32 %v301, %v1532
    %1536 = vst.msk [vmem:[#allocation31] sm:$0xff] %vm305, %v1535
    %v1537 = vld [vmem:[%s18] sm:$0x1]
    %v1538 = vld [vmem:[%s19] sm:$0x1]
    %v1539 = vsel %vm305, %v1535, 0.0
    %1540 = vadd.xlane.f32.xlu0 %v1539
    %v1541 = vpop.xlane.xlu0 %1540
    %v1542 = vmul.f32 %v1541, %v309
    %v1543 = vsub.f32 %v1535, %v1542
    %v1544 = vmul.f32 %v1543, %v1543
    %v1545 = vsel %vm305, %v1544, 0.0
    %1546 = vadd.xlane.f32.xlu0 %v1545
    %v1547 = vpop.xlane.xlu0 %1546
    %v1548 = vmul.f32 %v1547, %v309
    %v1549 = vadd.f32 %v1548, 1e-05
    %v1550 = vrsqrt.pop %v1549
    %v1551 = vmul.f32 %v1543, %v1550
    %v1553 = vlaneseq
    %v1554 = vshrl.u32 %v1553, 7
    %v1555 = vsub.s32 0, %v1554
    %v1556 = vrot.slane %v1537, %v1555
    %v1558 = vmul.f32 %v1551, %v1556
    %v1560 = vlaneseq
    %v1561 = vshrl.u32 %v1560, 7
    %v1562 = vsub.s32 0, %v1561
    %v1563 = vrot.slane %v1538, %v1562
    %v1565 = vadd.f32 %v1558, %v1563
    %v1566 = vld [vmem:[#allocation28] sm:$0xff]
    %v1567 = vld [vmem:[#allocation28 + $0x8] sm:$0xff]
    %v1568 = vld [vmem:[#allocation28 + $0x10] sm:$0xff]
    %v1569 = vld [vmem:[#allocation28 + $0x18] sm:$0xff]
    %v1571 = vsel %vm305, %v1565, 0
    %1573 = vmatprep.subr.mxu0 0.0
    %1574 = vmatpush1.msra.mxu0 0.0
    %1575 = vmatprep.subr.mxu0 0.0
    %1576 = vmatpush1.msra.mxu0 0.0
    %1577 = vmatprep.subr.mxu0 0.0
    %1578 = vmatpush1.msra.mxu0 0.0
    %1579 = vmatprep.subr.mxu0 0.0
    %1580 = vmatpush1.msra.mxu0 0.0
    %1581 = vmatprep.subr.mxu0 0.0
    %1582 = vmatpush1.msra.mxu0 0.0
    %1583 = vmatprep.subr.mxu0 0.0
    %1584 = vmatpush1.msra.mxu0 0.0
    %1585 = vmatprep.subr.mxu0 0.0
    %1586 = vmatpush1.msra.mxu0 0.0
    %1587 = vmatprep.subr.mxu0 0.0
    %1588 = vmatpush1.msra.mxu0 0.0
    %1589 = vmatprep.subr.mxu0 0.0
    %1590 = vmatpush1.msra.mxu0 0.0
    %1591 = vmatprep.subr.mxu0 0.0
    %1592 = vmatpush1.msra.mxu0 0.0
    %1593 = vmatprep.subr.mxu0 0.0
    %1594 = vmatpush1.msra.mxu0 0.0
    %1595 = vmatprep.subr.mxu0 0.0
    %1596 = vmatpush1.msra.mxu0 0.0
    %1597 = vmatprep.subr.mxu0 0.0
    %1598 = vmatpush1.msra.mxu0 %v1569
    %1599 = vmatprep.subr.mxu0 0.0
    %1600 = vmatpush1.msra.mxu0 %v1568
    %1601 = vmatprep.subr.mxu0 0.0
    %1602 = vmatpush1.msra.mxu0 %v1567
    %1603 = vmatprep.subr.mxu0 0.0
    %1604 = vmatpush1.msra.mxu0 %v1566
    %1605 = vmatprep.subr.mxu0 0.0
    %1606 = vmatpush2.msra.mxu0 0.0
    %1607 = vmatprep.subr.mxu0 0.0
    %1608 = vmatpush2.msra.mxu0 0.0
    %1609 = vmatprep.subr.mxu0 0.0
    %1610 = vmatpush2.msra.mxu0 0.0
    %1611 = vmatprep.subr.mxu0 0.0
    %1612 = vmatpush2.msra.mxu0 0.0
    %1613 = vmatprep.subr.mxu0 0.0
    %1614 = vmatpush2.msra.mxu0 0.0
    %1615 = vmatprep.subr.mxu0 0.0
    %1616 = vmatpush2.msra.mxu0 0.0
    %1617 = vmatprep.subr.mxu0 0.0
    %1618 = vmatpush2.msra.mxu0 0.0
    %1619 = vmatprep.subr.mxu0 0.0
    %1620 = vmatpush2.msra.mxu0 0.0
    %1621 = vmatprep.subr.mxu0 0.0
    %1622 = vmatpush2.msra.mxu0 0.0
    %1623 = vmatprep.subr.mxu0 0.0
    %1624 = vmatpush2.msra.mxu0 0.0
    %1625 = vmatprep.subr.mxu0 0.0
    %1626 = vmatpush2.msra.mxu0 0.0
    %1627 = vmatprep.subr.mxu0 0.0
    %1628 = vmatpush2.msra.mxu0 0.0
    %1629 = vmatprep.subr.mxu0 0.0
    %1630 = vmatpush2.msra.mxu0 0.0
    %1631 = vmatprep.subr.mxu0 0.0
    %1632 = vmatpush2.msra.mxu0 0.0
    %1633 = vmatprep.subr.mxu0 0.0
    %1634 = vmatpush2.msra.mxu0 0.0
    %1635 = vmatprep.subr.mxu0 0.0
    %1636 = vmatpush2.msra.mxu0 0.0
    %1637 = vmatprep.mubr.f32.mxu0 0.0
    %1638 = vmatmul.mubr.f32.gmra.mxu0 %v1571
    %v1639 = vpop.f32.mrf.mxu0
    %v1640 = vadd.f32 0.0, %v1639
    %v1641 = vpop.f32.mrf.mxu0
    %1642 = vdwg.mxu0
    %1643 = vst [vmem:[#allocation32] sm:$0xff] %v1640
    %v1644 = vld [vmem:[#allocation29] sm:$0xff]
    %v1645 = vld [vmem:[#allocation29 + $0x8] sm:$0xff]
    %v1646 = vld [vmem:[#allocation29 + $0x10] sm:$0xff]
    %v1647 = vld [vmem:[#allocation29 + $0x18] sm:$0xff]
    %1648 = vmatprep.subr.mxu0 0.0
    %1649 = vmatpush1.msra.mxu0 0.0
    %1650 = vmatprep.subr.mxu0 0.0
    %1651 = vmatpush1.msra.mxu0 0.0
    %1652 = vmatprep.subr.mxu0 0.0
    %1653 = vmatpush1.msra.mxu0 0.0
    %1654 = vmatprep.subr.mxu0 0.0
    %1655 = vmatpush1.msra.mxu0 0.0
    %1656 = vmatprep.subr.mxu0 0.0
    %1657 = vmatpush1.msra.mxu0 0.0
    %1658 = vmatprep.subr.mxu0 0.0
    %1659 = vmatpush1.msra.mxu0 0.0
    %1660 = vmatprep.subr.mxu0 0.0
    %1661 = vmatpush1.msra.mxu0 0.0
    %1662 = vmatprep.subr.mxu0 0.0
    %1663 = vmatpush1.msra.mxu0 0.0
    %1664 = vmatprep.subr.mxu0 0.0
    %1665 = vmatpush1.msra.mxu0 0.0
    %1666 = vmatprep.subr.mxu0 0.0
    %1667 = vmatpush1.msra.mxu0 0.0
    %1668 = vmatprep.subr.mxu0 0.0
    %1669 = vmatpush1.msra.mxu0 0.0
    %1670 = vmatprep.subr.mxu0 0.0
    %1671 = vmatpush1.msra.mxu0 0.0
    %1672 = vmatprep.subr.mxu0 0.0
    %1673 = vmatpush1.msra.mxu0 %v1647
    %1674 = vmatprep.subr.mxu0 0.0
    %1675 = vmatpush1.msra.mxu0 %v1646
    %1676 = vmatprep.subr.mxu0 0.0
    %1677 = vmatpush1.msra.mxu0 %v1645
    %1678 = vmatprep.subr.mxu0 0.0
    %1679 = vmatpush1.msra.mxu0 %v1644
    %1680 = vmatprep.subr.mxu0 0.0
    %1681 = vmatpush2.msra.mxu0 0.0
    %1682 = vmatprep.subr.mxu0 0.0
    %1683 = vmatpush2.msra.mxu0 0.0
    %1684 = vmatprep.subr.mxu0 0.0
    %1685 = vmatpush2.msra.mxu0 0.0
    %1686 = vmatprep.subr.mxu0 0.0
    %1687 = vmatpush2.msra.mxu0 0.0
    %1688 = vmatprep.subr.mxu0 0.0
    %1689 = vmatpush2.msra.mxu0 0.0
    %1690 = vmatprep.subr.mxu0 0.0
    %1691 = vmatpush2.msra.mxu0 0.0
    %1692 = vmatprep.subr.mxu0 0.0
    %1693 = vmatpush2.msra.mxu0 0.0
    %1694 = vmatprep.subr.mxu0 0.0
    %1695 = vmatpush2.msra.mxu0 0.0
    %1696 = vmatprep.subr.mxu0 0.0
    %1697 = vmatpush2.msra.mxu0 0.0
    %1698 = vmatprep.subr.mxu0 0.0
    %1699 = vmatpush2.msra.mxu0 0.0
    %1700 = vmatprep.subr.mxu0 0.0
    %1701 = vmatpush2.msra.mxu0 0.0
    %1702 = vmatprep.subr.mxu0 0.0
    %1703 = vmatpush2.msra.mxu0 0.0
    %1704 = vmatprep.subr.mxu0 0.0
    %1705 = vmatpush2.msra.mxu0 0.0
    %1706 = vmatprep.subr.mxu0 0.0
    %1707 = vmatpush2.msra.mxu0 0.0
    %1708 = vmatprep.subr.mxu0 0.0
    %1709 = vmatpush2.msra.mxu0 0.0
    %1710 = vmatprep.subr.mxu0 0.0
    %1711 = vmatpush2.msra.mxu0 0.0
    %1712 = vmatprep.mubr.f32.mxu0 0.0
    %1713 = vmatmul.mubr.f32.gmra.mxu0 %v1571
    %v1714 = vpop.f32.mrf.mxu0
    %v1715 = vadd.f32 0.0, %v1714
    %v1716 = vpop.f32.mrf.mxu0
    %1717 = vdwg.mxu0
    %v1719 = vcombine.high %v1715, %v1715
    %v1721 = vunpack.c.l.s4 1966171168
    %v1722 = vunpack.c.0.s8 %v1721
    %v1723 = vlaneseq
    %v1724 = vshrl.u32 %v1723, 7
    %v1725 = vsub.s32 %v1722, %v1724
    %v1726 = vrot.slane %v1715, %v1725
    %v1728 = vunpack.c.l.s4 1966171168
    %v1729 = vunpack.c.0.s8 %v1728
    %v1730 = vlaneseq
    %v1731 = vshrl.u32 %v1730, 7
    %v1732 = vsub.s32 %v1729, %v1731
    %v1733 = vrot.slane %v1719, %v1732
    %v1734 = vcombine.high %v1726, %v1726
    %v1735 = vcombine.high %v1733, %v1733
    %v1737 = vunpack.c.l.s4 1966171168
    %v1738 = vunpack.c.0.s8 %v1737
    %v1739 = vlaneseq
    %v1740 = vshrl.u32 %v1739, 7
    %v1741 = vsub.s32 %v1738, %v1740
    %v1742 = vrot.slane %v1726, %v1741
    %v1744 = vunpack.c.l.s4 1966171168
    %v1745 = vunpack.c.0.s8 %v1744
    %v1746 = vlaneseq
    %v1747 = vshrl.u32 %v1746, 7
    %v1748 = vsub.s32 %v1745, %v1747
    %v1749 = vrot.slane %v1733, %v1748
    %v1751 = vunpack.c.l.s4 1966171168
    %v1752 = vunpack.c.0.s8 %v1751
    %v1753 = vlaneseq
    %v1754 = vshrl.u32 %v1753, 7
    %v1755 = vsub.s32 %v1752, %v1754
    %v1756 = vrot.slane %v1734, %v1755
    %v1758 = vunpack.c.l.s4 1966171168
    %v1759 = vunpack.c.0.s8 %v1758
    %v1760 = vlaneseq
    %v1761 = vshrl.u32 %v1760, 7
    %v1762 = vsub.s32 %v1759, %v1761
    %v1763 = vrot.slane %v1735, %v1762
    %v1764 = vcombine.high %v1742, %v1742
    %v1765 = vcombine.high %v1749, %v1749
    %v1766 = vcombine.high %v1756, %v1756
    %v1767 = vcombine.high %v1763, %v1763
    %v1768 = vld [vmem:[%s22] sm:$0xf]
    %v1769 = vlaneseq
    %v1770 = vshrl.u32 %v1769, 7
    %v1771 = vsub.s32 0, %v1770
    %v1772 = vrot.slane %v1742, %v1771
    %v1773 = vlaneseq
    %v1774 = vshrl.u32 %v1773, 7
    %v1775 = vsub.s32 0, %v1774
    %v1776 = vrot.slane %v1756, %v1775
    %v1777 = vlaneseq
    %v1778 = vshrl.u32 %v1777, 7
    %v1779 = vsub.s32 0, %v1778
    %v1780 = vrot.slane %v1764, %v1779
    %v1781 = vlaneseq
    %v1782 = vshrl.u32 %v1781, 7
    %v1783 = vsub.s32 0, %v1782
    %v1784 = vrot.slane %v1766, %v1783
    %v1785 = vlaneseq
    %v1786 = vshrl.u32 %v1785, 7
    %v1787 = vsub.s32 0, %v1786
    %v1788 = vrot.slane %v1749, %v1787
    %v1789 = vlaneseq
    %v1790 = vshrl.u32 %v1789, 7
    %v1791 = vsub.s32 0, %v1790
    %v1792 = vrot.slane %v1763, %v1791
    %v1793 = vlaneseq
    %v1794 = vshrl.u32 %v1793, 7
    %v1795 = vsub.s32 0, %v1794
    %v1796 = vrot.slane %v1765, %v1795
    %v1797 = vlaneseq
    %v1798 = vshrl.u32 %v1797, 7
    %v1799 = vsub.s32 0, %v1798
    %v1800 = vrot.slane %v1767, %v1799
    %v1809 = vadd.f32 %v1772, %v1768
    %v1810 = vadd.f32 %v1776, %v1768
    %v1811 = vadd.f32 %v1780, %v1768
    %v1812 = vadd.f32 %v1784, %v1768
    %v1813 = vadd.f32 %v1788, %v1768
    %v1814 = vadd.f32 %v1792, %v1768
    %v1815 = vadd.f32 %v1796, %v1768
    %v1816 = vadd.f32 %v1800, %v1768
    %vm1817 = vcmask 519168
    %v1818 = vsel %vm1817, %v1809, -inf
    %1819 = vmax.xlane.f32.xlu0 %v1818
    %v1820 = vpop.xlane.xlu0 %1819
    %v1821 = vsel %vm1817, %v1810, -inf
    %1822 = vmax.xlane.f32.xlu0 %v1821
    %v1823 = vpop.xlane.xlu0 %1822
    %v1824 = vsel %vm1817, %v1811, -inf
    %1825 = vmax.xlane.f32.xlu0 %v1824
    %v1826 = vpop.xlane.xlu0 %1825
    %v1827 = vsel %vm1817, %v1812, -inf
    %1828 = vmax.xlane.f32.xlu0 %v1827
    %v1829 = vpop.xlane.xlu0 %1828
    %v1830 = vsel %vm1817, %v1813, -inf
    %1831 = vmax.xlane.f32.xlu0 %v1830
    %v1832 = vpop.xlane.xlu0 %1831
    %v1833 = vsel %vm1817, %v1814, -inf
    %1834 = vmax.xlane.f32.xlu0 %v1833
    %v1835 = vpop.xlane.xlu0 %1834
    %v1836 = vsel %vm1817, %v1815, -inf
    %1837 = vmax.xlane.f32.xlu0 %v1836
    %v1838 = vpop.xlane.xlu0 %1837
    %v1839 = vsel %vm1817, %v1816, -inf
    %1840 = vmax.xlane.f32.xlu0 %v1839
    %v1841 = vpop.xlane.xlu0 %1840
    %v1842 = vsub.f32 %v1809, %v1820
    %v1843 = vsub.f32 %v1810, %v1823
    %v1844 = vsub.f32 %v1811, %v1826
    %v1845 = vsub.f32 %v1812, %v1829
    %v1846 = vsub.f32 %v1813, %v1832
    %v1847 = vsub.f32 %v1814, %v1835
    %v1848 = vsub.f32 %v1815, %v1838
    %v1849 = vsub.f32 %v1816, %v1841
    %v1850 = vmul.f32 %v1842, 1.442695
    %v1851 = vpow.pop %v1850
    %v1852 = vmul.f32 %v1843, 1.442695
    %v1853 = vpow.pop %v1852
    %v1854 = vmul.f32 %v1844, 1.442695
    %v1855 = vpow.pop %v1854
    %v1856 = vmul.f32 %v1845, 1.442695
    %v1857 = vpow.pop %v1856
    %v1858 = vmul.f32 %v1846, 1.442695
    %v1859 = vpow.pop %v1858
    %v1860 = vmul.f32 %v1847, 1.442695
    %v1861 = vpow.pop %v1860
    %v1862 = vmul.f32 %v1848, 1.442695
    %v1863 = vpow.pop %v1862
    %v1864 = vmul.f32 %v1849, 1.442695
    %v1865 = vpow.pop %v1864
    %v1866 = vsel %vm1817, %v1851, 0.0
    %1867 = vadd.xlane.f32.xlu0 %v1866
    %v1868 = vpop.xlane.xlu0 %1867
    %v1869 = vsel %vm1817, %v1853, 0.0
    %1870 = vadd.xlane.f32.xlu0 %v1869
    %v1871 = vpop.xlane.xlu0 %1870
    %v1872 = vsel %vm1817, %v1855, 0.0
    %1873 = vadd.xlane.f32.xlu0 %v1872
    %v1874 = vpop.xlane.xlu0 %1873
    %v1875 = vsel %vm1817, %v1857, 0.0
    %1876 = vadd.xlane.f32.xlu0 %v1875
    %v1877 = vpop.xlane.xlu0 %1876
    %v1878 = vsel %vm1817, %v1859, 0.0
    %1879 = vadd.xlane.f32.xlu0 %v1878
    %v1880 = vpop.xlane.xlu0 %1879
    %v1881 = vsel %vm1817, %v1861, 0.0
    %1882 = vadd.xlane.f32.xlu0 %v1881
    %v1883 = vpop.xlane.xlu0 %1882
    %v1884 = vsel %vm1817, %v1863, 0.0
    %1885 = vadd.xlane.f32.xlu0 %v1884
    %v1886 = vpop.xlane.xlu0 %1885
    %v1887 = vsel %vm1817, %v1865, 0.0
    %1888 = vadd.xlane.f32.xlu0 %v1887
    %v1889 = vpop.xlane.xlu0 %1888
    %v1890 = vrcp.pop %v1868
    %v1891 = vrcp.pop %v1871
    %v1892 = vrcp.pop %v1874
    %v1893 = vrcp.pop %v1877
    %v1894 = vrcp.pop %v1880
    %v1895 = vrcp.pop %v1883
    %v1896 = vrcp.pop %v1886
    %v1897 = vrcp.pop %v1889
    %v1898 = vmul.f32 %v1851, %v1890
    %v1899 = vmul.f32 %v1853, %v1891
    %v1900 = vmul.f32 %v1855, %v1892
    %v1901 = vmul.f32 %v1857, %v1893
    %v1902 = vmul.f32 %v1859, %v1894
    %v1903 = vmul.f32 %v1861, %v1895
    %v1904 = vmul.f32 %v1863, %v1896
    %v1905 = vmul.f32 %v1865, %v1897
    %1906 = vst.msk [vmem:[#allocation34] sm:$0xf] %vm1817, %v1898
    %1907 = vst.msk [vmem:[#allocation34 + $0x4] sm:$0xf] %vm1817, %v1899
    %1908 = vst.msk [vmem:[#allocation34 + $0x8] sm:$0xf] %vm1817, %v1900
    %1909 = vst.msk [vmem:[#allocation34 + $0xc] sm:$0xf] %vm1817, %v1901
    %1910 = vst.msk [vmem:[#allocation34 + $0x10] sm:$0xf] %vm1817, %v1902
    %1911 = vst.msk [vmem:[#allocation34 + $0x14] sm:$0xf] %vm1817, %v1903
    %1912 = vst.msk [vmem:[#allocation34 + $0x18] sm:$0xf] %vm1817, %v1904
    %1913 = vst.msk [vmem:[#allocation34 + $0x1c] sm:$0xf] %vm1817, %v1905
    // Predicated region
    $region166: #{tpu_custom_call.1} parent=1 // pred_check
      _
    $region167: #{tpu_custom_call.1} parent=1 // pred_check_branch
      %1915 = sbr.rel (0) target = $region169
    $region168: #{tpu_custom_call.1} parent=1 // pred_region
      %s1917 = ssub.s32 128, 128
      %1918 = vsyncadd [#allocation4], %s1917
      %s1920 = sshll.u32 [#allocation31], 4
      %s1921 = int_to_ptr.vmem [resolvable:$true] %s1920
      %1923 = dma.vmem_to_hbm [thread:$0]  %s1921, 128, %s23, [#allocation4]
    $region169: #{tpu_custom_call.1} parent=1 // pred_fallthru
      _
    // Predicated region
    $region170: #{tpu_custom_call.1} parent=1 // pred_check
      _
    $region171: #{tpu_custom_call.1} parent=1 // pred_check_branch
      %1925 = sbr.rel (0) target = $region173
    $region172: #{tpu_custom_call.1} parent=1 // pred_region
      %s1927 = ssub.s32 128, 128
      %1928 = vsyncadd [#allocation33], %s1927
      %s1930 = sshll.u32 [#allocation32], 4
      %s1931 = int_to_ptr.vmem [resolvable:$true] %s1930
      %1933 = dma.vmem_to_hbm [thread:$0]  %s1931, 128, %s24, [#allocation33]
    $region173: #{tpu_custom_call.1} parent=1 // pred_fallthru
      _
    // Predicated region
    $region174: #{tpu_custom_call.1} parent=1 // pred_check
      _
    $region175: #{tpu_custom_call.1} parent=1 // pred_check_branch
      %1935 = sbr.rel (0) target = $region177
    $region176: #{tpu_custom_call.1} parent=1 // pred_region
      %s1937 = ssub.s32 512, 512
      %1938 = vsyncadd [#allocation33], %s1937
      %s1939 = sshll.u32 [#allocation34], 4
      %s1940 = int_to_ptr.vmem [resolvable:$true] %s1939
      %1945 = dma.vmem_to_hbm [thread:$0]  %s1940, 512, %s25, [#allocation33], 64, 64, 4
    $region177: #{tpu_custom_call.1} parent=1 // pred_fallthru
      _
    // Predicated region
    $region178: #{tpu_custom_call.1} parent=1 // pred_check
      _
    $region179: #{tpu_custom_call.1} parent=1 // pred_check_branch
      %1947 = sbr.rel (0) target = $region181
    $region180: #{tpu_custom_call.1} parent=1 // pred_region
      %1948 = dma.done [#allocation4], 128
    $region181: #{tpu_custom_call.1} parent=1 // pred_fallthru
      _
    // Predicated region
    $region182: #{tpu_custom_call.1} parent=1 // pred_check
      _
    $region183: #{tpu_custom_call.1} parent=1 // pred_check_branch
      %1950 = sbr.rel (0) target = $region185
    $region184: #{tpu_custom_call.1} parent=1 // pred_region
      %1951 = dma.done [#allocation33], 128
    $region185: #{tpu_custom_call.1} parent=1 // pred_fallthru
      _
    // Predicated region
    $region186: #{tpu_custom_call.1} parent=1 // pred_check
      _
    $region187: #{tpu_custom_call.1} parent=1 // pred_check_branch
      %1953 = sbr.rel (0) target = $region189
    $region188: #{tpu_custom_call.1} parent=1 // pred_region
      %1954 = dma.done [#allocation33], 512
    $region189: #{tpu_custom_call.1} parent=1 // pred_fallthru
      _
    %1955 = vsyncpa [#allocation3], 1
    %1956 = vsyncpa [#allocation6], 1
    %1957 = vsyncpa [#allocation9], 1
    %1958 = vsyncpa [#allocation12], 1
    %1959 = vsyncpa [#allocation15], 1
    %1960 = vsyncpa [#allocation18], 1
    %1961 = vsyncpa [#allocation21], 1
    %1962 = vsyncpa [#allocation24], 1
    %1963 = vsyncpa [#allocation27], 1
    %1964 = vsyncpa [#allocation30], 1
    %1965 = vsyncpa [#allocation4], 1
    %1966 = vsyncpa [#allocation33], 1

</llo_original>
